<compile_context>
chip_gen: v5e
topology: v5e:2x2
jax: 0.10.0
libtpu: 0.0.40
codegen_flags: <defaults>
</compile_context>

<pallas_src>
import functools
import math

import jax
import jax.numpy as jnp
from jax.experimental import pallas as pl
from jax.experimental.pallas import tpu as pltpu

# ---------------- configuration (small synthetic ViT) ----------------
B = 2                       # batch
C_IN = 3                    # image channels
IMG = 16                    # image height/width
PATCH = 4                   # patch size
N_PATCH = (IMG // PATCH) ** 2          # 16 patches
T = N_PATCH + 1                         # tokens = patches + CLS = 17
T_PAD = 24                  # tokens padded to a multiple of 8 sublanes
D = 32                      # hidden dim
HEADS = 2
HEAD_DIM = D // HEADS
MLP = 4 * D
DEPTH = 3                   # transformer blocks in the feature model
N_LAST_BLOCKS = 2           # n_last_blocks argument of the wrapper
CFLAT = C_IN * PATCH * PATCH            # 48
EPS = 1e-6


# ---------------- in-kernel helpers ----------------
def _layernorm(v, g, b):
    mu = jnp.mean(v, axis=-1, keepdims=True)
    var = jnp.mean(jnp.square(v - mu), axis=-1, keepdims=True)
    return (v - mu) * jax.lax.rsqrt(var + EPS) * g + b


# ---------------- fused Pallas kernel ----------------
def fused_vit_kernel(patch_ref, pw_ref, tokadd_ref, kbias_ref,
                     ln1g_ref, ln1b_ref, qkvw_ref, qkvb_ref,
                     projw_ref, projb_ref, ln2g_ref, ln2b_ref,
                     fc1w_ref, fc1b_ref, fc2w_ref, fc2b_ref,
                     ng_ref, nb_ref,
                     out_ref, x_ref, *, first_out):
    """One grid step = one (batch element, transformer block) pair.

    x_ref (VMEM scratch, [T_PAD, D] f32) holds this batch element's token slab
    and persists across the depth ("arbitrary") grid axis.
    """
    d = pl.program_id(1)

    # ---- token assembly (only at the first block of each batch element) ----
    # patch_ref already has zero rows for CLS/pad, so one dense matmul plus a
    # precomputed additive table (cls+pos / pos+patch_bias / 0) builds the slab
    # with no masked stores and no scratch round-trip.
    @pl.when(d == 0)
    def _init_tokens():
        x_ref[...] = (jnp.dot(patch_ref[...], pw_ref[...],
                              preferred_element_type=jnp.float32)
                      + tokadd_ref[...])

    x = x_ref[...]                       # [T_PAD, D] f32
    kbias = kbias_ref[...]               # [1, T_PAD] additive key-pad bias

    # ---- attention branch ----
    h = _layernorm(x, ln1g_ref[...], ln1b_ref[...])
    qkv = (jnp.dot(h.astype(jnp.bfloat16), qkvw_ref[...],
                   preferred_element_type=jnp.float32) + qkvb_ref[...])
    scale = 1.0 / math.sqrt(HEAD_DIM)
    q = (qkv[:, 0 * D:1 * D] * scale).astype(jnp.bfloat16)   # scale folded, cast once
    k = qkv[:, 1 * D:2 * D].astype(jnp.bfloat16)
    v = qkv[:, 2 * D:3 * D].astype(jnp.bfloat16)

    head_outs = []
    for hh in range(HEADS):
        sl = slice(hh * HEAD_DIM, (hh + 1) * HEAD_DIM)
        # scores: [T_PAD, hd] x [T_PAD, hd]^T -> [T_PAD, T_PAD], f32 accumulate
        s = jax.lax.dot_general(q[:, sl], k[:, sl],
                                (((1,), (1,)), ((), ())),
                                preferred_element_type=jnp.float32) + kbias
        m = jnp.max(s, axis=-1, keepdims=True)
        e = jnp.exp(s - m)
        p = e * pl.reciprocal(jnp.sum(e, axis=-1, keepdims=True), approx=True)
        head_outs.append(jnp.dot(p.astype(jnp.bfloat16), v[:, sl],
                                 preferred_element_type=jnp.float32))
    # heads land on adjacent lane slices -> one full-width projection matmul
    attn = jnp.concatenate(head_outs, axis=-1)                # [T_PAD, D] f32
    x = x + (jnp.dot(attn.astype(jnp.bfloat16), projw_ref[...],
                     preferred_element_type=jnp.float32) + projb_ref[...])

    # ---- MLP branch ----
    h2 = _layernorm(x, ln2g_ref[...], ln2b_ref[...])
    h2 = (jnp.dot(h2.astype(jnp.bfloat16), fc1w_ref[...],
                  preferred_element_type=jnp.float32) + fc1b_ref[...])
    # TODO(synk): DINOv2 uses exact (erf) GELU; tanh approximation kept for
    # guaranteed Mosaic lowering (small numeric drift vs the torch reference).
    h2 = jax.nn.gelu(h2, approximate=True)
    h2 = (jnp.dot(h2.astype(jnp.bfloat16), fc2w_ref[...],
                  preferred_element_type=jnp.float32) + fc2b_ref[...])
    x = x + h2
    x_ref[...] = x

    # ---- emit final-LayerNorm'ed output for the last n blocks ----
    @pl.when(d >= first_out)
    def _emit():
        out_ref[...] = _layernorm(x, ng_ref[...], nb_ref[...])


# ---------------- cost estimate (advisory, for XLA scheduling) ----------------
def _cost_estimate(n_last):
    mm = lambda m, k, n: 2 * m * k * n
    per_block = (mm(T_PAD, D, 3 * D)
                 + HEADS * (mm(T_PAD, HEAD_DIM, T_PAD) + mm(T_PAD, T_PAD, HEAD_DIM))
                 + mm(T_PAD, D, D)
                 + mm(T_PAD, D, MLP) + mm(T_PAD, MLP, D))
    flops = B * (mm(T_PAD, CFLAT, D) + DEPTH * per_block)
    transcendentals = B * DEPTH * (HEADS * T_PAD * T_PAD + T_PAD * MLP + 4 * T_PAD)
    w_bytes = 2 * (D * 3 * D + D * D + D * MLP + MLP * D) + 4 * (8 * D + MLP)
    bytes_accessed = (B * T_PAD * CFLAT * 2 + CFLAT * D * 2 + T_PAD * D * 4
                      + T_PAD * 4 + B * DEPTH * w_bytes + 2 * D * 4
                      + n_last * B * T_PAD * D * 4)
    return pl.CostEstimate(flops=flops, transcendentals=transcendentals,
                           bytes_accessed=bytes_accessed)


# ---------------- pallas_call wrapper ----------------
def run_fused_vit(patches_padded, pp, n_last):
    first_out = DEPTH - n_last

    args = [patches_padded, pp["patch_w"], pp["tok_add"], pp["kbias"],
            pp["ln1_g"], pp["ln1_b"], pp["qkv_w"], pp["qkv_b"],
            pp["proj_w"], pp["proj_b"], pp["ln2_g"], pp["ln2_b"],
            pp["fc1_w"], pp["fc1_b"], pp["fc2_w"], pp["fc2_b"],
            pp["norm_g"], pp["norm_b"]]

    const2d = lambda shape: pl.BlockSpec(shape, lambda b, d: (0, 0))
    # per-transformer-block weights: stacked on a leading depth axis, streamed
    # (double-buffered) one block per grid step along the depth axis.
    perblk = lambda shape: pl.BlockSpec((None,) + shape, lambda b, d: (d, 0, 0))

    in_specs = [
        pl.BlockSpec((T_PAD, CFLAT), lambda b, d: (b, 0)),    # padded patches
        const2d((CFLAT, D)),                                  # patch_w
        const2d((T_PAD, D)),                                  # cls/pos/bias table
        const2d((1, T_PAD)),                                  # additive key mask
        perblk((1, D)), perblk((1, D)),                       # ln1 g/b
        perblk((D, 3 * D)), perblk((1, 3 * D)),               # qkv w/b
        perblk((D, D)), perblk((1, D)),                       # proj w/b
        perblk((1, D)), perblk((1, D)),                       # ln2 g/b
        perblk((D, MLP)), perblk((1, MLP)),                   # fc1 w/b
        perblk((MLP, D)), perblk((1, D)),                     # fc2 w/b
        const2d((1, D)), const2d((1, D)),                     # final norm g/b
    ]
    # output block (layer_slot, batch): only written when d >= first_out;
    # block index is monotone so write-back happens after the block is filled.
    out_spec = pl.BlockSpec(
        (None, T_PAD, D),
        lambda b, d: (jnp.maximum(d - first_out, 0), b, 0))

    return pl.pallas_call(
        functools.partial(fused_vit_kernel, first_out=first_out),
        out_shape=jax.ShapeDtypeStruct((n_last, B * T_PAD, D), jnp.float32),
        grid=(B, DEPTH),
        in_specs=in_specs,
        out_specs=out_spec,
        scratch_shapes=[pltpu.VMEM((T_PAD, D), jnp.float32)],
        compiler_params=pltpu.CompilerParams(
            dimension_semantics=("parallel", "arbitrary"),
            vmem_limit_bytes=32 * 1024 * 1024),
        cost_estimate=_cost_estimate(n_last),
    )(*args)


# ---------------- glue (plain JAX) ----------------
def patchify(images):
    # NCHW -> [B, N_PATCH, C*P*P], flattened in (c, ph, pw) order to match
    # Conv2d(patch, stride=patch) weight flattening.
    Bn, C, H, W = images.shape
    gh, gw = H // PATCH, W // PATCH
    x = images.reshape(Bn, C, gh, PATCH, gw, PATCH)
    x = x.transpose(0, 2, 4, 1, 3, 5)
    return x.reshape(Bn, gh * gw, C * PATCH * PATCH)


def build_padded_patches(images):
    """[B*T_PAD, CFLAT] bf16: row 0 (CLS) and rows T..T_PAD-1 are zero."""
    p = patchify(images)                                        # [B, N_PATCH, CFLAT]
    padded = jnp.zeros((B, T_PAD, CFLAT), jnp.float32)
    padded = padded.at[:, 1:T, :].set(p)
    return padded.reshape(B * T_PAD, CFLAT).astype(jnp.bfloat16)


def pack_params(params):
    """Stack per-block weights on a depth axis; cast matmul weights to bf16;
    fold CLS token, position embedding and patch bias into one additive table."""
    bf = lambda a: a.astype(jnp.bfloat16)
    blocks = params["blocks"]
    stack = lambda k: jnp.stack([bp[k] for bp in blocks], axis=0)

    cls_row = params["cls_token"].reshape(1, D) + params["pos_embed"][0, 0:1, :]
    patch_rows = params["pos_embed"][0, 1:T, :] + params["patch_b"]      # [N_PATCH, D]
    tok_add = jnp.zeros((T_PAD, D), jnp.float32)
    tok_add = tok_add.at[0:1, :].set(cls_row)
    tok_add = tok_add.at[1:T, :].set(patch_rows)

    kbias = jnp.where(jnp.arange(T_PAD) < T, 0.0, -1e9).astype(jnp.float32)
    kbias = kbias.reshape(1, T_PAD)

    return {
        "patch_w": bf(params["patch_w"]),                        # [CFLAT, D]
        "tok_add": tok_add,                                      # [T_PAD, D]
        "kbias": kbias,                                          # [1, T_PAD]
        "ln1_g": stack("ln1_g"), "ln1_b": stack("ln1_b"),
        "qkv_w": bf(stack("qkv_w")), "qkv_b": stack("qkv_b"),
        "proj_w": bf(stack("proj_w")), "proj_b": stack("proj_b"),
        "ln2_g": stack("ln2_g"), "ln2_b": stack("ln2_b"),
        "fc1_w": bf(stack("fc1_w")), "fc1_b": stack("fc1_b"),
        "fc2_w": bf(stack("fc2_w")), "fc2_b": stack("fc2_b"),
        "norm_g": params["norm_g"], "norm_b": params["norm_b"],
    }


def get_intermediate_layers(images, packed, n, return_class_token=True):
    padded = build_padded_patches(images)
    out = run_fused_vit(padded, packed, n)           # [n, B*T_PAD, D] f32
    out = out.reshape(n, B, T_PAD, D)
    results = []
    for i in range(n):
        normed = out[i]
        patch_tok = normed[:, 1:T, :]
        if return_class_token:
            results.append((patch_tok, normed[:, 0, :]))
        else:
            results.append(patch_tok)
    return tuple(results)


class ModelWithIntermediateLayers:
    """JAX/Pallas equivalent of the PyTorch wrapper.

    eval() and torch.inference_mode() are no-ops here (pure inference);
    autocast_ctx is realized as bf16 matmuls with f32 accumulation.
    """

    def __init__(self, feature_model_params, n_last_blocks):
        self.packed = pack_params(feature_model_params)
        self.n_last_blocks = n_last_blocks
        self._fwd = jax.jit(
            functools.partial(get_intermediate_layers, n=n_last_blocks))

    def __call__(self, images):
        return self._fwd(images, self.packed)


# ---------------- deterministic parameter init ----------------
def init_params(key):
    keys = jax.random.split(key, 4 + DEPTH)
    params = {
        "patch_w": (jax.random.normal(keys[0], (D, C_IN, PATCH, PATCH)) * 0.02
                    ).reshape(D, CFLAT).T.astype(jnp.float32),
        "patch_b": jnp.zeros((1, D), jnp.float32),
        "cls_token": (jax.random.normal(keys[1], (1, 1, D)) * 0.02
                      ).astype(jnp.float32),
        "pos_embed": (jax.random.normal(keys[2], (1, T, D)) * 0.02
                      ).astype(jnp.float32),
        "norm_g": jnp.ones((1, D), jnp.float32),
        "norm_b": jnp.zeros((1, D), jnp.float32),
    }
    blocks = []
    for i in range(DEPTH):
        bk = jax.random.split(keys[3 + i], 4)
        blocks.append({
            "ln1_g": jnp.ones((1, D), jnp.float32),
            "ln1_b": jnp.zeros((1, D), jnp.float32),
            "qkv_w": (jax.random.normal(bk[0], (D, 3 * D)) * 0.02).astype(jnp.float32),
            "qkv_b": jnp.zeros((1, 3 * D), jnp.float32),
            "proj_w": (jax.random.normal(bk[1], (D, D)) * 0.02).astype(jnp.float32),
            "proj_b": jnp.zeros((1, D), jnp.float32),
            "ln2_g": jnp.ones((1, D), jnp.float32),
            "ln2_b": jnp.zeros((1, D), jnp.float32),
            "fc1_w": (jax.random.normal(bk[2], (D, MLP)) * 0.02).astype(jnp.float32),
            "fc1_b": jnp.zeros((1, MLP), jnp.float32),
            "fc2_w": (jax.random.normal(bk[3], (MLP, D)) * 0.02).astype(jnp.float32),
            "fc2_b": jnp.zeros((1, D), jnp.float32),
        })
    params["blocks"] = blocks
    return params


if __name__ == "__main__":
    key = jax.random.PRNGKey(0)
    pkey, xkey = jax.random.split(key)
    params = init_params(pkey)
    images = jax.random.normal(xkey, (B, C_IN, IMG, IMG), jnp.float32)

    model = ModelWithIntermediateLayers(params, N_LAST_BLOCKS)
    features = model(images)
    features = jax.block_until_ready(features)

    assert len(features) == N_LAST_BLOCKS
    for patch_tok, cls_tok in features:
        assert patch_tok.shape == (B, N_PATCH, D)
        assert cls_tok.shape == (B, D)
        assert patch_tok.dtype == jnp.float32 and cls_tok.dtype == jnp.float32
        assert bool(jnp.all(jnp.isfinite(patch_tok)))
        assert bool(jnp.all(jnp.isfinite(cls_tok)))

    print("KERNEL_OK")
</pallas_src>

<mosaic_0001>
module attributes {stable_mosaic.version = 11 : i64} {
  func.func @fused_vit_kernel(%arg0: i32, %arg1: i32, %arg2: memref<24x48xbf16, #tpu.memory_space<vmem>>, %arg3: memref<48x32xbf16, #tpu.memory_space<vmem>>, %arg4: memref<24x32xf32, #tpu.memory_space<vmem>>, %arg5: memref<1x24xf32, #tpu.memory_space<vmem>>, %arg6: memref<1x1x32xf32, #tpu.memory_space<vmem>>, %arg7: memref<1x1x32xf32, #tpu.memory_space<vmem>>, %arg8: memref<1x32x96xbf16, #tpu.memory_space<vmem>>, %arg9: memref<1x1x96xf32, #tpu.memory_space<vmem>>, %arg10: memref<1x32x32xbf16, #tpu.memory_space<vmem>>, %arg11: memref<1x1x32xf32, #tpu.memory_space<vmem>>, %arg12: memref<1x1x32xf32, #tpu.memory_space<vmem>>, %arg13: memref<1x1x32xf32, #tpu.memory_space<vmem>>, %arg14: memref<1x32x128xbf16, #tpu.memory_space<vmem>>, %arg15: memref<1x1x128xf32, #tpu.memory_space<vmem>>, %arg16: memref<1x128x32xbf16, #tpu.memory_space<vmem>>, %arg17: memref<1x1x32xf32, #tpu.memory_space<vmem>>, %arg18: memref<1x32xf32, #tpu.memory_space<vmem>>, %arg19: memref<1x32xf32, #tpu.memory_space<vmem>>, %arg20: memref<1x24x32xf32, #tpu.memory_space<vmem>>, %arg21: memref<24x32xf32, #tpu.memory_space<vmem>>) attributes {dimension_semantics = [#tpu.dimension_semantics<parallel>, #tpu.dimension_semantics<arbitrary>], iteration_bounds = array<i64: 2, 3>, scalar_prefetch = 0 : i64, scratch_operands = 1 : i64, tpu.core_type = #tpu.core_type<tc>, window_params = [{transform_indices = @transform_0, window_bounds = array<i64: 24, 48>}, {pipeline_mode = #tpu.pipeline_mode<synchronous>, transform_indices = @transform_1, window_bounds = array<i64: 48, 32>}, {pipeline_mode = #tpu.pipeline_mode<synchronous>, transform_indices = @transform_2, window_bounds = array<i64: 24, 32>}, {pipeline_mode = #tpu.pipeline_mode<synchronous>, transform_indices = @transform_3, window_bounds = array<i64: 1, 24>}, {transform_indices = @transform_4, window_bounds = array<i64: 1, 1, 32>}, {transform_indices = @transform_5, window_bounds = array<i64: 1, 1, 32>}, {transform_indices = @transform_6, window_bounds = array<i64: 1, 32, 96>}, {transform_indices = @transform_7, window_bounds = array<i64: 1, 1, 96>}, {transform_indices = @transform_8, window_bounds = array<i64: 1, 32, 32>}, {transform_indices = @transform_9, window_bounds = array<i64: 1, 1, 32>}, {transform_indices = @transform_10, window_bounds = array<i64: 1, 1, 32>}, {transform_indices = @transform_11, window_bounds = array<i64: 1, 1, 32>}, {transform_indices = @transform_12, window_bounds = array<i64: 1, 32, 128>}, {transform_indices = @transform_13, window_bounds = array<i64: 1, 1, 128>}, {transform_indices = @transform_14, window_bounds = array<i64: 1, 128, 32>}, {transform_indices = @transform_15, window_bounds = array<i64: 1, 1, 32>}, {pipeline_mode = #tpu.pipeline_mode<synchronous>, transform_indices = @transform_16, window_bounds = array<i64: 1, 32>}, {pipeline_mode = #tpu.pipeline_mode<synchronous>, transform_indices = @transform_17, window_bounds = array<i64: 1, 32>}, {transform_indices = @transform_18, window_bounds = array<i64: 1, 24, 32>}]} {
    %c0_i32 = arith.constant 0 : i32
    %0 = arith.cmpi eq, %arg1, %c0_i32 : i32
    %1 = arith.extui %0 : i1 to i32
    %c0_i32_0 = arith.constant 0 : i32
    %2 = arith.cmpi ne, %1, %c0_i32_0 : i32
    scf.if %2 {
      %c0_69 = arith.constant 0 : index
      %c0_70 = arith.constant 0 : index
      %153 = vector.load %arg2[%c0_69, %c0_70] : memref<24x48xbf16, #tpu.memory_space<vmem>>, vector<24x48xbf16>
      %c0_71 = arith.constant 0 : index
      %c0_72 = arith.constant 0 : index
      %154 = vector.load %arg3[%c0_71, %c0_72] : memref<48x32xbf16, #tpu.memory_space<vmem>>, vector<48x32xbf16>
      %cst_73 = arith.constant dense<0.000000e+00> : vector<24x32xf32>
      %155 = tpu.matmul %153, %154, %cst_73 {dimension_numbers = #tpu.dot_dimension_numbers<[1], [0], [0], [1], [0, 0, 1, 1], [], []>} : vector<24x48xbf16>, vector<48x32xbf16>, vector<24x32xf32> -> vector<24x32xf32>
      %c0_74 = arith.constant 0 : index
      %c0_75 = arith.constant 0 : index
      %156 = vector.load %arg4[%c0_74, %c0_75] : memref<24x32xf32, #tpu.memory_space<vmem>>, vector<24x32xf32>
      %157 = arith.addf %155, %156 : vector<24x32xf32>
      %c0_76 = arith.constant 0 : index
      %c0_77 = arith.constant 0 : index
      %158 = vector.load %arg21[%c0_76, %c0_77] : memref<24x32xf32, #tpu.memory_space<vmem>>, vector<24x32xf32>
      tpu.vector_store %arg21[%c0_76, %c0_77], %157 {strides = array<i32>} : memref<24x32xf32, #tpu.memory_space<vmem>>, vector<24x32xf32>,
    } else {
    }
    %c0 = arith.constant 0 : index
    %c0_1 = arith.constant 0 : index
    %3 = vector.load %arg21[%c0, %c0_1] : memref<24x32xf32, #tpu.memory_space<vmem>>, vector<24x32xf32>
    %c0_2 = arith.constant 0 : index
    %c0_3 = arith.constant 0 : index
    %4 = vector.load %arg5[%c0_2, %c0_3] : memref<1x24xf32, #tpu.memory_space<vmem>>, vector<1x24xf32>
    %c0_4 = arith.constant 0 : index
    %c0_5 = arith.constant 0 : index
    %c0_6 = arith.constant 0 : index
    %5 = vector.load %arg6[%c0_4, %c0_5, %c0_6] : memref<1x1x32xf32, #tpu.memory_space<vmem>>, vector<1x1x32xf32>
    %6 = vector.shape_cast %5 : vector<1x1x32xf32> to vector<1x32xf32>
    %c0_7 = arith.constant 0 : index
    %c0_8 = arith.constant 0 : index
    %c0_9 = arith.constant 0 : index
    %7 = vector.load %arg7[%c0_7, %c0_8, %c0_9] : memref<1x1x32xf32, #tpu.memory_space<vmem>>, vector<1x1x32xf32>
    %8 = vector.shape_cast %7 : vector<1x1x32xf32> to vector<1x32xf32>
    %cst = arith.constant dense<0.000000e+00> : vector<24xf32>
    %9 = vector.multi_reduction <add>, %3, %cst [1] : vector<24x32xf32> to vector<24xf32>
    %10 = vector.shape_cast %9 : vector<24xf32> to vector<24x1xf32>
    %cst_10 = arith.constant 3.200000e+01 : f32
    %11 = vector.broadcast %cst_10 : f32 to vector<24x1xf32>
    %12 = arith.divf %10, %11 : vector<24x1xf32>
    %13 = vector.broadcast %12 : vector<24x1xf32> to vector<24x32xf32>
    %14 = arith.subf %3, %13 : vector<24x32xf32>
    %15 = arith.mulf %14, %14 : vector<24x32xf32>
    %cst_11 = arith.constant dense<0.000000e+00> : vector<24xf32>
    %16 = vector.multi_reduction <add>, %15, %cst_11 [1] : vector<24x32xf32> to vector<24xf32>
    %17 = vector.shape_cast %16 : vector<24xf32> to vector<24x1xf32>
    %cst_12 = arith.constant 3.200000e+01 : f32
    %18 = vector.broadcast %cst_12 : f32 to vector<24x1xf32>
    %19 = arith.divf %17, %18 : vector<24x1xf32>
    %20 = vector.broadcast %12 : vector<24x1xf32> to vector<24x32xf32>
    %21 = arith.subf %3, %20 : vector<24x32xf32>
    %cst_13 = arith.constant 9.99999997E-7 : f32
    %22 = vector.broadcast %cst_13 : f32 to vector<24x1xf32>
    %23 = arith.addf %19, %22 : vector<24x1xf32>
    %24 = math.rsqrt %23 : vector<24x1xf32>
    %25 = vector.broadcast %24 : vector<24x1xf32> to vector<24x32xf32>
    %26 = arith.mulf %21, %25 : vector<24x32xf32>
    %27 = vector.broadcast %6 : vector<1x32xf32> to vector<24x32xf32>
    %28 = arith.mulf %26, %27 : vector<24x32xf32>
    %29 = vector.broadcast %8 : vector<1x32xf32> to vector<24x32xf32>
    %30 = arith.addf %28, %29 : vector<24x32xf32>
    %31 = arith.truncf %30 : vector<24x32xf32> to vector<24x32xbf16>
    %c0_14 = arith.constant 0 : index
    %c0_15 = arith.constant 0 : index
    %c0_16 = arith.constant 0 : index
    %32 = vector.load %arg8[%c0_14, %c0_15, %c0_16] : memref<1x32x96xbf16, #tpu.memory_space<vmem>>, vector<1x32x96xbf16>
    %33 = vector.shape_cast %32 : vector<1x32x96xbf16> to vector<32x96xbf16>
    %cst_17 = arith.constant dense<0.000000e+00> : vector<24x96xf32>
    %34 = tpu.matmul %31, %33, %cst_17 {dimension_numbers = #tpu.dot_dimension_numbers<[1], [0], [0], [1], [0, 0, 1, 1], [], []>} : vector<24x32xbf16>, vector<32x96xbf16>, vector<24x96xf32> -> vector<24x96xf32>
    %c0_18 = arith.constant 0 : index
    %c0_19 = arith.constant 0 : index
    %c0_20 = arith.constant 0 : index
    %35 = vector.load %arg9[%c0_18, %c0_19, %c0_20] : memref<1x1x96xf32, #tpu.memory_space<vmem>>, vector<1x1x96xf32>
    %36 = vector.shape_cast %35 : vector<1x1x96xf32> to vector<1x96xf32>
    %37 = vector.broadcast %36 : vector<1x96xf32> to vector<24x96xf32>
    %38 = arith.addf %34, %37 : vector<24x96xf32>
    %39 = vector.extract_strided_slice %38 {offsets = [0, 0], sizes = [24, 32], strides = [1, 1]} : vector<24x96xf32> to vector<24x32xf32>
    %cst_21 = arith.constant 2.500000e-01 : f32
    %40 = vector.broadcast %cst_21 : f32 to vector<24x32xf32>
    %41 = arith.mulf %39, %40 : vector<24x32xf32>
    %42 = arith.truncf %41 : vector<24x32xf32> to vector<24x32xbf16>
    %43 = vector.extract_strided_slice %38 {offsets = [0, 32], sizes = [24, 32], strides = [1, 1]} : vector<24x96xf32> to vector<24x32xf32>
    %44 = arith.truncf %43 : vector<24x32xf32> to vector<24x32xbf16>
    %45 = vector.extract_strided_slice %38 {offsets = [0, 64], sizes = [24, 32], strides = [1, 1]} : vector<24x96xf32> to vector<24x32xf32>
    %46 = arith.truncf %45 : vector<24x32xf32> to vector<24x32xbf16>
    %47 = vector.extract_strided_slice %42 {offsets = [0, 0], sizes = [24, 16], strides = [1, 1]} : vector<24x32xbf16> to vector<24x16xbf16>
    %48 = vector.extract_strided_slice %44 {offsets = [0, 0], sizes = [24, 16], strides = [1, 1]} : vector<24x32xbf16> to vector<24x16xbf16>
    %cst_22 = arith.constant dense<0.000000e+00> : vector<24x24xf32>
    %49 = tpu.matmul %47, %48, %cst_22 {dimension_numbers = #tpu.dot_dimension_numbers<[1], [1], [0], [0], [0, 0, 1, 0], [], []>} : vector<24x16xbf16>, vector<24x16xbf16>, vector<24x24xf32> -> vector<24x24xf32>
    %50 = vector.broadcast %4 : vector<1x24xf32> to vector<24x24xf32>
    %51 = arith.addf %49, %50 : vector<24x24xf32>
    %cst_23 = arith.constant dense<0xFF800000> : vector<24xf32>
    %52 = vector.multi_reduction <maximumf>, %51, %cst_23 [1] : vector<24x24xf32> to vector<24xf32>
    %53 = vector.shape_cast %52 : vector<24xf32> to vector<24x1xf32>
    %54 = vector.broadcast %53 : vector<24x1xf32> to vector<24x24xf32>
    %55 = arith.subf %51, %54 : vector<24x24xf32>
    %56 = math.exp %55 : vector<24x24xf32>
    %cst_24 = arith.constant dense<0.000000e+00> : vector<24xf32>
    %57 = vector.multi_reduction <add>, %56, %cst_24 [1] : vector<24x24xf32> to vector<24xf32>
    %58 = vector.shape_cast %57 : vector<24xf32> to vector<24x1xf32>
    %59 = tpu.reciprocal %58 {approx = true} : vector<24x1xf32> -> vector<24x1xf32>
    %60 = vector.broadcast %59 : vector<24x1xf32> to vector<24x24xf32>
    %61 = arith.mulf %56, %60 : vector<24x24xf32>
    %62 = arith.truncf %61 : vector<24x24xf32> to vector<24x24xbf16>
    %63 = vector.extract_strided_slice %46 {offsets = [0, 0], sizes = [24, 16], strides = [1, 1]} : vector<24x32xbf16> to vector<24x16xbf16>
    %cst_25 = arith.constant dense<0.000000e+00> : vector<24x16xf32>
    %64 = tpu.matmul %62, %63, %cst_25 {dimension_numbers = #tpu.dot_dimension_numbers<[1], [0], [0], [1], [0, 0, 1, 1], [], []>} : vector<24x24xbf16>, vector<24x16xbf16>, vector<24x16xf32> -> vector<24x16xf32>
    %65 = vector.extract_strided_slice %42 {offsets = [0, 16], sizes = [24, 16], strides = [1, 1]} : vector<24x32xbf16> to vector<24x16xbf16>
    %66 = vector.extract_strided_slice %44 {offsets = [0, 16], sizes = [24, 16], strides = [1, 1]} : vector<24x32xbf16> to vector<24x16xbf16>
    %cst_26 = arith.constant dense<0.000000e+00> : vector<24x24xf32>
    %67 = tpu.matmul %65, %66, %cst_26 {dimension_numbers = #tpu.dot_dimension_numbers<[1], [1], [0], [0], [0, 0, 1, 0], [], []>} : vector<24x16xbf16>, vector<24x16xbf16>, vector<24x24xf32> -> vector<24x24xf32>
    %68 = vector.broadcast %4 : vector<1x24xf32> to vector<24x24xf32>
    %69 = arith.addf %67, %68 : vector<24x24xf32>
    %cst_27 = arith.constant dense<0xFF800000> : vector<24xf32>
    %70 = vector.multi_reduction <maximumf>, %69, %cst_27 [1] : vector<24x24xf32> to vector<24xf32>
    %71 = vector.shape_cast %70 : vector<24xf32> to vector<24x1xf32>
    %72 = vector.broadcast %71 : vector<24x1xf32> to vector<24x24xf32>
    %73 = arith.subf %69, %72 : vector<24x24xf32>
    %74 = math.exp %73 : vector<24x24xf32>
    %cst_28 = arith.constant dense<0.000000e+00> : vector<24xf32>
    %75 = vector.multi_reduction <add>, %74, %cst_28 [1] : vector<24x24xf32> to vector<24xf32>
    %76 = vector.shape_cast %75 : vector<24xf32> to vector<24x1xf32>
    %77 = tpu.reciprocal %76 {approx = true} : vector<24x1xf32> -> vector<24x1xf32>
    %78 = vector.broadcast %77 : vector<24x1xf32> to vector<24x24xf32>
    %79 = arith.mulf %74, %78 : vector<24x24xf32>
    %80 = arith.truncf %79 : vector<24x24xf32> to vector<24x24xbf16>
    %81 = vector.extract_strided_slice %46 {offsets = [0, 16], sizes = [24, 16], strides = [1, 1]} : vector<24x32xbf16> to vector<24x16xbf16>
    %cst_29 = arith.constant dense<0.000000e+00> : vector<24x16xf32>
    %82 = tpu.matmul %80, %81, %cst_29 {dimension_numbers = #tpu.dot_dimension_numbers<[1], [0], [0], [1], [0, 0, 1, 1], [], []>} : vector<24x24xbf16>, vector<24x16xbf16>, vector<24x16xf32> -> vector<24x16xf32>
    %83 = tpu.concatenate %64, %82 in 1 : vector<24x16xf32>, vector<24x16xf32> -> vector<24x32xf32>
    %84 = arith.truncf %83 : vector<24x32xf32> to vector<24x32xbf16>
    %c0_30 = arith.constant 0 : index
    %c0_31 = arith.constant 0 : index
    %c0_32 = arith.constant 0 : index
    %85 = vector.load %arg10[%c0_30, %c0_31, %c0_32] : memref<1x32x32xbf16, #tpu.memory_space<vmem>>, vector<1x32x32xbf16>
    %86 = vector.shape_cast %85 : vector<1x32x32xbf16> to vector<32x32xbf16>
    %cst_33 = arith.constant dense<0.000000e+00> : vector<24x32xf32>
    %87 = tpu.matmul %84, %86, %cst_33 {dimension_numbers = #tpu.dot_dimension_numbers<[1], [0], [0], [1], [0, 0, 1, 1], [], []>} : vector<24x32xbf16>, vector<32x32xbf16>, vector<24x32xf32> -> vector<24x32xf32>
    %c0_34 = arith.constant 0 : index
    %c0_35 = arith.constant 0 : index
    %c0_36 = arith.constant 0 : index
    %88 = vector.load %arg11[%c0_34, %c0_35, %c0_36] : memref<1x1x32xf32, #tpu.memory_space<vmem>>, vector<1x1x32xf32>
    %89 = vector.shape_cast %88 : vector<1x1x32xf32> to vector<1x32xf32>
    %90 = vector.broadcast %89 : vector<1x32xf32> to vector<24x32xf32>
    %91 = arith.addf %87, %90 : vector<24x32xf32>
    %92 = arith.addf %3, %91 : vector<24x32xf32>
    %c0_37 = arith.constant 0 : index
    %c0_38 = arith.constant 0 : index
    %c0_39 = arith.constant 0 : index
    %93 = vector.load %arg12[%c0_37, %c0_38, %c0_39] : memref<1x1x32xf32, #tpu.memory_space<vmem>>, vector<1x1x32xf32>
    %94 = vector.shape_cast %93 : vector<1x1x32xf32> to vector<1x32xf32>
    %c0_40 = arith.constant 0 : index
    %c0_41 = arith.constant 0 : index
    %c0_42 = arith.constant 0 : index
    %95 = vector.load %arg13[%c0_40, %c0_41, %c0_42] : memref<1x1x32xf32, #tpu.memory_space<vmem>>, vector<1x1x32xf32>
    %96 = vector.shape_cast %95 : vector<1x1x32xf32> to vector<1x32xf32>
    %cst_43 = arith.constant dense<0.000000e+00> : vector<24xf32>
    %97 = vector.multi_reduction <add>, %92, %cst_43 [1] : vector<24x32xf32> to vector<24xf32>
    %98 = vector.shape_cast %97 : vector<24xf32> to vector<24x1xf32>
    %cst_44 = arith.constant 3.200000e+01 : f32
    %99 = vector.broadcast %cst_44 : f32 to vector<24x1xf32>
    %100 = arith.divf %98, %99 : vector<24x1xf32>
    %101 = vector.broadcast %100 : vector<24x1xf32> to vector<24x32xf32>
    %102 = arith.subf %92, %101 : vector<24x32xf32>
    %103 = arith.mulf %102, %102 : vector<24x32xf32>
    %cst_45 = arith.constant dense<0.000000e+00> : vector<24xf32>
    %104 = vector.multi_reduction <add>, %103, %cst_45 [1] : vector<24x32xf32> to vector<24xf32>
    %105 = vector.shape_cast %104 : vector<24xf32> to vector<24x1xf32>
    %cst_46 = arith.constant 3.200000e+01 : f32
    %106 = vector.broadcast %cst_46 : f32 to vector<24x1xf32>
    %107 = arith.divf %105, %106 : vector<24x1xf32>
    %108 = vector.broadcast %100 : vector<24x1xf32> to vector<24x32xf32>
    %109 = arith.subf %92, %108 : vector<24x32xf32>
    %cst_47 = arith.constant 9.99999997E-7 : f32
    %110 = vector.broadcast %cst_47 : f32 to vector<24x1xf32>
    %111 = arith.addf %107, %110 : vector<24x1xf32>
    %112 = math.rsqrt %111 : vector<24x1xf32>
    %113 = vector.broadcast %112 : vector<24x1xf32> to vector<24x32xf32>
    %114 = arith.mulf %109, %113 : vector<24x32xf32>
    %115 = vector.broadcast %94 : vector<1x32xf32> to vector<24x32xf32>
    %116 = arith.mulf %114, %115 : vector<24x32xf32>
    %117 = vector.broadcast %96 : vector<1x32xf32> to vector<24x32xf32>
    %118 = arith.addf %116, %117 : vector<24x32xf32>
    %119 = arith.truncf %118 : vector<24x32xf32> to vector<24x32xbf16>
    %c0_48 = arith.constant 0 : index
    %c0_49 = arith.constant 0 : index
    %c0_50 = arith.constant 0 : index
    %120 = vector.load %arg14[%c0_48, %c0_49, %c0_50] : memref<1x32x128xbf16, #tpu.memory_space<vmem>>, vector<1x32x128xbf16>
    %121 = vector.shape_cast %120 : vector<1x32x128xbf16> to vector<32x128xbf16>
    %cst_51 = arith.constant dense<0.000000e+00> : vector<24x128xf32>
    %122 = tpu.matmul %119, %121, %cst_51 {dimension_numbers = #tpu.dot_dimension_numbers<[1], [0], [0], [1], [0, 0, 1, 1], [], []>} : vector<24x32xbf16>, vector<32x128xbf16>, vector<24x128xf32> -> vector<24x128xf32>
    %c0_52 = arith.constant 0 : index
    %c0_53 = arith.constant 0 : index
    %c0_54 = arith.constant 0 : index
    %123 = vector.load %arg15[%c0_52, %c0_53, %c0_54] : memref<1x1x128xf32, #tpu.memory_space<vmem>>, vector<1x1x128xf32>
    %124 = vector.shape_cast %123 : vector<1x1x128xf32> to vector<1x128xf32>
    %125 = vector.broadcast %124 : vector<1x128xf32> to vector<24x128xf32>
    %126 = arith.addf %122, %125 : vector<24x128xf32>
    %127 = arith.mulf %126, %126 : vector<24x128xf32>
    %128 = arith.mulf %126, %127 : vector<24x128xf32>
    %cst_55 = arith.constant 4.471500e-02 : f32
    %129 = vector.broadcast %cst_55 : f32 to vector<24x128xf32>
    %130 = arith.mulf %129, %128 : vector<24x128xf32>
    %131 = arith.addf %126, %130 : vector<24x128xf32>
    %cst_56 = arith.constant 0.797884583 : f32
    %132 = vector.broadcast %cst_56 : f32 to vector<24x128xf32>
    %133 = arith.mulf %132, %131 : vector<24x128xf32>
    %134 = math.tanh %133 : vector<24x128xf32>
    %cst_57 = arith.constant 1.000000e+00 : f32
    %135 = vector.broadcast %cst_57 : f32 to vector<24x128xf32>
    %136 = arith.addf %135, %134 : vector<24x128xf32>
    %cst_58 = arith.constant 5.000000e-01 : f32
    %137 = vector.broadcast %cst_58 : f32 to vector<24x128xf32>
    %138 = arith.mulf %137, %136 : vector<24x128xf32>
    %139 = arith.mulf %126, %138 : vector<24x128xf32>
    %140 = arith.truncf %139 : vector<24x128xf32> to vector<24x128xbf16>
    %c0_59 = arith.constant 0 : index
    %c0_60 = arith.constant 0 : index
    %c0_61 = arith.constant 0 : index
    %141 = vector.load %arg16[%c0_59, %c0_60, %c0_61] : memref<1x128x32xbf16, #tpu.memory_space<vmem>>, vector<1x128x32xbf16>
    %142 = vector.shape_cast %141 : vector<1x128x32xbf16> to vector<128x32xbf16>
    %cst_62 = arith.constant dense<0.000000e+00> : vector<24x32xf32>
    %143 = tpu.matmul %140, %142, %cst_62 {dimension_numbers = #tpu.dot_dimension_numbers<[1], [0], [0], [1], [0, 0, 1, 1], [], []>} : vector<24x128xbf16>, vector<128x32xbf16>, vector<24x32xf32> -> vector<24x32xf32>
    %c0_63 = arith.constant 0 : index
    %c0_64 = arith.constant 0 : index
    %c0_65 = arith.constant 0 : index
    %144 = vector.load %arg17[%c0_63, %c0_64, %c0_65] : memref<1x1x32xf32, #tpu.memory_space<vmem>>, vector<1x1x32xf32>
    %145 = vector.shape_cast %144 : vector<1x1x32xf32> to vector<1x32xf32>
    %146 = vector.broadcast %145 : vector<1x32xf32> to vector<24x32xf32>
    %147 = arith.addf %143, %146 : vector<24x32xf32>
    %148 = arith.addf %92, %147 : vector<24x32xf32>
    %c0_66 = arith.constant 0 : index
    %c0_67 = arith.constant 0 : index
    %149 = vector.load %arg21[%c0_66, %c0_67] : memref<24x32xf32, #tpu.memory_space<vmem>>, vector<24x32xf32>
    tpu.vector_store %arg21[%c0_66, %c0_67], %148 {strides = array<i32>} : memref<24x32xf32, #tpu.memory_space<vmem>>, vector<24x32xf32>,
    %c1_i32 = arith.constant 1 : i32
    %150 = arith.cmpi sge, %arg1, %c1_i32 : i32
    %151 = arith.extui %150 : i1 to i32
    %c0_i32_68 = arith.constant 0 : i32
    %152 = arith.cmpi ne, %151, %c0_i32_68 : i32
    scf.if %152 {
      %c0_69 = arith.constant 0 : index
      %c0_70 = arith.constant 0 : index
      %153 = vector.load %arg18[%c0_69, %c0_70] : memref<1x32xf32, #tpu.memory_space<vmem>>, vector<1x32xf32>
      %c0_71 = arith.constant 0 : index
      %c0_72 = arith.constant 0 : index
      %154 = vector.load %arg19[%c0_71, %c0_72] : memref<1x32xf32, #tpu.memory_space<vmem>>, vector<1x32xf32>
      %cst_73 = arith.constant dense<0.000000e+00> : vector<24xf32>
      %155 = vector.multi_reduction <add>, %148, %cst_73 [1] : vector<24x32xf32> to vector<24xf32>
      %156 = vector.shape_cast %155 : vector<24xf32> to vector<24x1xf32>
      %cst_74 = arith.constant 3.200000e+01 : f32
      %157 = vector.broadcast %cst_74 : f32 to vector<24x1xf32>
      %158 = arith.divf %156, %157 : vector<24x1xf32>
      %159 = vector.broadcast %158 : vector<24x1xf32> to vector<24x32xf32>
      %160 = arith.subf %148, %159 : vector<24x32xf32>
      %161 = arith.mulf %160, %160 : vector<24x32xf32>
      %cst_75 = arith.constant dense<0.000000e+00> : vector<24xf32>
      %162 = vector.multi_reduction <add>, %161, %cst_75 [1] : vector<24x32xf32> to vector<24xf32>
      %163 = vector.shape_cast %162 : vector<24xf32> to vector<24x1xf32>
      %cst_76 = arith.constant 3.200000e+01 : f32
      %164 = vector.broadcast %cst_76 : f32 to vector<24x1xf32>
      %165 = arith.divf %163, %164 : vector<24x1xf32>
      %166 = vector.broadcast %158 : vector<24x1xf32> to vector<24x32xf32>
      %167 = arith.subf %148, %166 : vector<24x32xf32>
      %cst_77 = arith.constant 9.99999997E-7 : f32
      %168 = vector.broadcast %cst_77 : f32 to vector<24x1xf32>
      %169 = arith.addf %165, %168 : vector<24x1xf32>
      %170 = math.rsqrt %169 : vector<24x1xf32>
      %171 = vector.broadcast %170 : vector<24x1xf32> to vector<24x32xf32>
      %172 = arith.mulf %167, %171 : vector<24x32xf32>
      %173 = vector.broadcast %153 : vector<1x32xf32> to vector<24x32xf32>
      %174 = arith.mulf %172, %173 : vector<24x32xf32>
      %175 = vector.broadcast %154 : vector<1x32xf32> to vector<24x32xf32>
      %176 = arith.addf %174, %175 : vector<24x32xf32>
      %c0_78 = arith.constant 0 : index
      %c0_79 = arith.constant 0 : index
      %c0_80 = arith.constant 0 : index
      %177 = vector.load %arg20[%c0_78, %c0_79, %c0_80] : memref<1x24x32xf32, #tpu.memory_space<vmem>>, vector<1x24x32xf32>
      %178 = vector.shape_cast %177 : vector<1x24x32xf32> to vector<24x32xf32>
      %179 = vector.shape_cast %176 : vector<24x32xf32> to vector<1x24x32xf32>
      tpu.vector_store %arg20[%c0_78, %c0_79, %c0_80], %179 {strides = array<i32>} : memref<1x24x32xf32, #tpu.memory_space<vmem>>, vector<1x24x32xf32>,
    } else {
    }
    return
  }
  func.func @transform_0(%arg0: i32, %arg1: i32) -> (i32, i32) {
    %c0_i32 = arith.constant 0 : i32
    %c0_i32_0 = arith.constant 0 : i32
    return %arg0, %c0_i32 : i32, i32
  }
  func.func @transform_1(%arg0: i32, %arg1: i32) -> (i32, i32) {
    %c0_i32 = arith.constant 0 : i32
    %c0_i32_0 = arith.constant 0 : i32
    %c0_i32_1 = arith.constant 0 : i32
    return %c0_i32, %c0_i32_0 : i32, i32
  }
  func.func @transform_2(%arg0: i32, %arg1: i32) -> (i32, i32) {
    %c0_i32 = arith.constant 0 : i32
    %c0_i32_0 = arith.constant 0 : i32
    %c0_i32_1 = arith.constant 0 : i32
    return %c0_i32, %c0_i32_0 : i32, i32
  }
  func.func @transform_3(%arg0: i32, %arg1: i32) -> (i32, i32) {
    %c0_i32 = arith.constant 0 : i32
    %c0_i32_0 = arith.constant 0 : i32
    %c0_i32_1 = arith.constant 0 : i32
    return %c0_i32, %c0_i32_0 : i32, i32
  }
  func.func @transform_4(%arg0: i32, %arg1: i32) -> (i32, i32, i32) {
    %c0_i32 = arith.constant 0 : i32
    %c0_i32_0 = arith.constant 0 : i32
    %c0_i32_1 = arith.constant 0 : i32
    return %arg1, %c0_i32, %c0_i32_0 : i32, i32, i32
  }
  func.func @transform_5(%arg0: i32, %arg1: i32) -> (i32, i32, i32) {
    %c0_i32 = arith.constant 0 : i32
    %c0_i32_0 = arith.constant 0 : i32
    %c0_i32_1 = arith.constant 0 : i32
    return %arg1, %c0_i32, %c0_i32_0 : i32, i32, i32
  }
  func.func @transform_6(%arg0: i32, %arg1: i32) -> (i32, i32, i32) {
    %c0_i32 = arith.constant 0 : i32
    %c0_i32_0 = arith.constant 0 : i32
    %c0_i32_1 = arith.constant 0 : i32
    return %arg1, %c0_i32, %c0_i32_0 : i32, i32, i32
  }
  func.func @transform_7(%arg0: i32, %arg1: i32) -> (i32, i32, i32) {
    %c0_i32 = arith.constant 0 : i32
    %c0_i32_0 = arith.constant 0 : i32
    %c0_i32_1 = arith.constant 0 : i32
    return %arg1, %c0_i32, %c0_i32_0 : i32, i32, i32
  }
  func.func @transform_8(%arg0: i32, %arg1: i32) -> (i32, i32, i32) {
    %c0_i32 = arith.constant 0 : i32
    %c0_i32_0 = arith.constant 0 : i32
    %c0_i32_1 = arith.constant 0 : i32
    return %arg1, %c0_i32, %c0_i32_0 : i32, i32, i32
  }
  func.func @transform_9(%arg0: i32, %arg1: i32) -> (i32, i32, i32) {
    %c0_i32 = arith.constant 0 : i32
    %c0_i32_0 = arith.constant 0 : i32
    %c0_i32_1 = arith.constant 0 : i32
    return %arg1, %c0_i32, %c0_i32_0 : i32, i32, i32
  }
  func.func @transform_10(%arg0: i32, %arg1: i32) -> (i32, i32, i32) {
    %c0_i32 = arith.constant 0 : i32
    %c0_i32_0 = arith.constant 0 : i32
    %c0_i32_1 = arith.constant 0 : i32
    return %arg1, %c0_i32, %c0_i32_0 : i32, i32, i32
  }
  func.func @transform_11(%arg0: i32, %arg1: i32) -> (i32, i32, i32) {
    %c0_i32 = arith.constant 0 : i32
    %c0_i32_0 = arith.constant 0 : i32
    %c0_i32_1 = arith.constant 0 : i32
    return %arg1, %c0_i32, %c0_i32_0 : i32, i32, i32
  }
  func.func @transform_12(%arg0: i32, %arg1: i32) -> (i32, i32, i32) {
    %c0_i32 = arith.constant 0 : i32
    %c0_i32_0 = arith.constant 0 : i32
    %c0_i32_1 = arith.constant 0 : i32
    return %arg1, %c0_i32, %c0_i32_0 : i32, i32, i32
  }
  func.func @transform_13(%arg0: i32, %arg1: i32) -> (i32, i32, i32) {
    %c0_i32 = arith.constant 0 : i32
    %c0_i32_0 = arith.constant 0 : i32
    %c0_i32_1 = arith.constant 0 : i32
    return %arg1, %c0_i32, %c0_i32_0 : i32, i32, i32
  }
  func.func @transform_14(%arg0: i32, %arg1: i32) -> (i32, i32, i32) {
    %c0_i32 = arith.constant 0 : i32
    %c0_i32_0 = arith.constant 0 : i32
    %c0_i32_1 = arith.constant 0 : i32
    return %arg1, %c0_i32, %c0_i32_0 : i32, i32, i32
  }
  func.func @transform_15(%arg0: i32, %arg1: i32) -> (i32, i32, i32) {
    %c0_i32 = arith.constant 0 : i32
    %c0_i32_0 = arith.constant 0 : i32
    %c0_i32_1 = arith.constant 0 : i32
    return %arg1, %c0_i32, %c0_i32_0 : i32, i32, i32
  }
  func.func @transform_16(%arg0: i32, %arg1: i32) -> (i32, i32) {
    %c0_i32 = arith.constant 0 : i32
    %c0_i32_0 = arith.constant 0 : i32
    %c0_i32_1 = arith.constant 0 : i32
    return %c0_i32, %c0_i32_0 : i32, i32
  }
  func.func @transform_17(%arg0: i32, %arg1: i32) -> (i32, i32) {
    %c0_i32 = arith.constant 0 : i32
    %c0_i32_0 = arith.constant 0 : i32
    %c0_i32_1 = arith.constant 0 : i32
    return %c0_i32, %c0_i32_0 : i32, i32
  }
  func.func @transform_18(%arg0: i32, %arg1: i32) -> (i32, i32, i32) {
    %c1_i32 = arith.constant 1 : i32
    %0 = arith.subi %arg1, %c1_i32 : i32
    %c0_i32 = arith.constant 0 : i32
    %1 = arith.maxsi %0, %c0_i32 : i32
    %c0_i32_0 = arith.constant 0 : i32
    %c0_i32_1 = arith.constant 0 : i32
    return %1, %arg0, %c0_i32_0 : i32, i32, i32
  }
}

</mosaic_0001>

<llo_original>
// kernel: get_intermediate_layers.1
$region0: #{get_intermediate_layers.1}
  #allocation0 [shape = 'u32[]', space=smem, size = 0x4, offset = 0x4, fixed_abs, tag = 'smem constant byte address 0x4 - core index']
  #allocation1 [shape = 'u32[72,128]{1,0:T(1,128)}', space=vmem, size = 0x9000, scoped, tag = 'internal scratch']
  #allocation2 [shape = 'f32[24,32]{1,0:T(8,128)}', space=vmem, size = 0x3000, scoped, tag = 'scratch operand']
  %s0 = inlined_call_operand.vmem [shape: bf16[48,48], index: 0, kind: input, shape index: {}]
  %s1 = inlined_call_operand.vmem [shape: bf16[48,32], index: 1, kind: input, shape index: {}]
  %s2 = inlined_call_operand.vmem [shape: f32[24,32], index: 2, kind: input, shape index: {}]
  %s3 = inlined_call_operand.vmem [shape: f32[1,24], index: 3, kind: input, shape index: {}]
  %s4 = inlined_call_operand.vmem [shape: f32[3,1,32], index: 4, kind: input, shape index: {}]
  %s5 = inlined_call_operand.vmem [shape: f32[3,1,32], index: 5, kind: input, shape index: {}]
  %s6 = inlined_call_operand.vmem [shape: bf16[3,32,96], index: 6, kind: input, shape index: {}]
  %s7 = inlined_call_operand.vmem [shape: f32[3,1,96], index: 7, kind: input, shape index: {}]
  %s8 = inlined_call_operand.vmem [shape: bf16[3,32,32], index: 8, kind: input, shape index: {}]
  %s9 = inlined_call_operand.vmem [shape: f32[3,1,32], index: 9, kind: input, shape index: {}]
  %s10 = inlined_call_operand.vmem [shape: f32[3,1,32], index: 10, kind: input, shape index: {}]
  %s11 = inlined_call_operand.vmem [shape: f32[3,1,32], index: 11, kind: input, shape index: {}]
  %s12 = inlined_call_operand.vmem [shape: bf16[3,32,128], index: 12, kind: input, shape index: {}]
  %s13 = inlined_call_operand.vmem [shape: f32[3,1,128], index: 13, kind: input, shape index: {}]
  %s14 = inlined_call_operand.vmem [shape: bf16[3,128,32], index: 14, kind: input, shape index: {}]
  %s15 = inlined_call_operand.vmem [shape: f32[3,1,32], index: 15, kind: input, shape index: {}]
  %s16 = inlined_call_operand.vmem [shape: f32[1,32], index: 16, kind: input, shape index: {}]
  %s17 = inlined_call_operand.vmem [shape: f32[1,32], index: 17, kind: input, shape index: {}]
  %s18 = inlined_call_operand.vmem [shape: f32[2,48,32], index: 18, kind: output, shape index: {}]
  %s19 = sld [smem:[#allocation0]]
  $region113: #{get_intermediate_layers.1} parent=0
    _
  %s21 = ssub.s32 1, %s19
  %s22 = scalar_select 0, %s21, %s19
  loop: start=0, step=1, limit=8
  $region2: #{get_intermediate_layers.1} parent=0 // loop_pre_header
    _
  $region3: #{get_intermediate_layers.1} parent=0 // loop_header
    %s24 = sphi 0, %s28
    %p25 = scmp.ge.s32.totalorder %s24, 8
    %s31 = sphi 0, %s43
    %s32 = sphi 0, %s39
    %s33 = sphi 0, %s31
    %s34 = sphi 0, %s32
    %s35 = sphi 0, %s33
    %s36 = sphi 0, %s34
    %s46 = sphi 0, %s48
    %s49 = sphi 0, %s46
    %s50 = sphi 0, %s49
    %s66 = sphi 0, %s50
    %s70 = sphi 0, %s70
    %s72 = sphi 0, %s70
    %s73 = sphi 0, %s72
    %s87 = sphi 0, %s73
    %s91 = sphi 0, %s91
    %s93 = sphi 0, %s91
    %s94 = sphi 0, %s93
    %s108 = sphi 0, %s94
    %s112 = sphi 0, %s112
    %s114 = sphi 0, %s112
    %s115 = sphi 0, %s114
    %s129 = sphi 0, %s115
    %s135 = sphi 0, %s137
    %s138 = sphi 0, %s135
    %s139 = sphi 0, %s138
    %s155 = sphi 0, %s139
    %s161 = sphi 0, %s163
    %s164 = sphi 0, %s161
    %s165 = sphi 0, %s164
    %s181 = sphi 0, %s165
    %s187 = sphi 0, %s189
    %s190 = sphi 0, %s187
    %s191 = sphi 0, %s190
    %s207 = sphi 0, %s191
    %s213 = sphi 0, %s215
    %s216 = sphi 0, %s213
    %s217 = sphi 0, %s216
    %s233 = sphi 0, %s217
    %s239 = sphi 0, %s241
    %s242 = sphi 0, %s239
    %s243 = sphi 0, %s242
    %s259 = sphi 0, %s243
    %s265 = sphi 0, %s267
    %s268 = sphi 0, %s265
    %s269 = sphi 0, %s268
    %s285 = sphi 0, %s269
    %s291 = sphi 0, %s293
    %s294 = sphi 0, %s291
    %s295 = sphi 0, %s294
    %s311 = sphi 0, %s295
    %s317 = sphi 0, %s319
    %s320 = sphi 0, %s317
    %s321 = sphi 0, %s320
    %s337 = sphi 0, %s321
    %s343 = sphi 0, %s345
    %s346 = sphi 0, %s343
    %s347 = sphi 0, %s346
    %s363 = sphi 0, %s347
    %s369 = sphi 0, %s371
    %s372 = sphi 0, %s369
    %s373 = sphi 0, %s372
    %s389 = sphi 0, %s373
    %s395 = sphi 0, %s397
    %s398 = sphi 0, %s395
    %s399 = sphi 0, %s398
    %s415 = sphi 0, %s399
    %s421 = sphi 0, %s423
    %s424 = sphi 0, %s421
    %s425 = sphi 0, %s424
    %s441 = sphi 0, %s425
    %s445 = sphi 0, %s445
    %s447 = sphi 0, %s445
    %s448 = sphi 0, %s447
    %s462 = sphi 0, %s448
    %s466 = sphi 0, %s466
    %s468 = sphi 0, %s466
    %s469 = sphi 0, %s468
    %s483 = sphi 0, %s469
    %s497 = sphi 0, %s499
    %s500 = sphi 0, %s497
    %s501 = sphi 0, %s500
    %s517 = sphi 0, %s501
  $region4: #{get_intermediate_layers.1} parent=0 // loop_header_branch
    %27 = sbr.rel (%p25) target = $region8
  $region5: #{get_intermediate_layers.1} parent=0 // loop_body
    %s29 = ssub.s32 %s24, 1
    %s30 = ssub.s32 %s24, 2
    %s37 = sadd.s32 1, %s32
    %p38 = scmp.ge.s32.totalorder %s37, 3
    %s39 = scalar_select %p38, 0, %s37
    %s40 = sadd.s32 1, %s31
    %s41 = scalar_select %p38, %s40, %s31
    %p42 = scmp.ge.s32.totalorder %s41, 2
    %s43 = scalar_select %p42, 0, %s41
    %s44 = ssub.s32 %s31, %s43
    %p45 = scmp.eq.s32.totalorder %s44, 0
    %s47 = sadd.s32 %s46, 1
    %s48 = scalar_select %p45, %s46, %s47
    %p51 = pneg %p45
    %p52 = scmp.eq.s32.totalorder %s24, 5
    %p53 = por %p51, %p52
    %p54 = scmp.ne.s32.totalorder %s46, %s49
    %p55 = scmp.eq.s32.totalorder %s24, 0
    %p56 = por %p54, %p55
    %p57 = scmp.ne.s32.totalorder %s46, %s49
    %p58 = scmp.eq.s32.totalorder %s29, 5
    %p59 = por %p57, %p58
    %p60 = scmp.ne.s32.totalorder %s49, %s50
    %p61 = scmp.eq.s32.totalorder %s29, 0
    %p62 = por %p60, %p61
    %p63 = scmp.ne.s32.totalorder %s49, %s50
    %p64 = scmp.eq.s32.totalorder %s30, 5
    %p65 = por %p63, %p64
    %p67 = scmp.ne.s32.totalorder %s50, %s66
    %p68 = scmp.eq.s32.totalorder %s30, 0
    %p69 = por %p67, %p68
    %s71 = sadd.s32 %s70, 1
    %p74 = scmp.eq.s32.totalorder %s24, 5
    %p75 = scmp.ne.s32.totalorder %s70, %s72
    %p76 = scmp.eq.s32.totalorder %s24, 0
    %p77 = por %p75, %p76
    %p78 = scmp.ne.s32.totalorder %s70, %s72
    %p79 = scmp.eq.s32.totalorder %s29, 5
    %p80 = por %p78, %p79
    %p81 = scmp.ne.s32.totalorder %s72, %s73
    %p82 = scmp.eq.s32.totalorder %s29, 0
    %p83 = por %p81, %p82
    %p84 = scmp.ne.s32.totalorder %s72, %s73
    %p85 = scmp.eq.s32.totalorder %s30, 5
    %p86 = por %p84, %p85
    %p88 = scmp.ne.s32.totalorder %s73, %s87
    %p89 = scmp.eq.s32.totalorder %s30, 0
    %p90 = por %p88, %p89
    %s92 = sadd.s32 %s91, 1
    %p95 = scmp.eq.s32.totalorder %s24, 5
    %p96 = scmp.ne.s32.totalorder %s91, %s93
    %p97 = scmp.eq.s32.totalorder %s24, 0
    %p98 = por %p96, %p97
    %p99 = scmp.ne.s32.totalorder %s91, %s93
    %p100 = scmp.eq.s32.totalorder %s29, 5
    %p101 = por %p99, %p100
    %p102 = scmp.ne.s32.totalorder %s93, %s94
    %p103 = scmp.eq.s32.totalorder %s29, 0
    %p104 = por %p102, %p103
    %p105 = scmp.ne.s32.totalorder %s93, %s94
    %p106 = scmp.eq.s32.totalorder %s30, 5
    %p107 = por %p105, %p106
    %p109 = scmp.ne.s32.totalorder %s94, %s108
    %p110 = scmp.eq.s32.totalorder %s30, 0
    %p111 = por %p109, %p110
    %s113 = sadd.s32 %s112, 1
    %p116 = scmp.eq.s32.totalorder %s24, 5
    %p117 = scmp.ne.s32.totalorder %s112, %s114
    %p118 = scmp.eq.s32.totalorder %s24, 0
    %p119 = por %p117, %p118
    %p120 = scmp.ne.s32.totalorder %s112, %s114
    %p121 = scmp.eq.s32.totalorder %s29, 5
    %p122 = por %p120, %p121
    %p123 = scmp.ne.s32.totalorder %s114, %s115
    %p124 = scmp.eq.s32.totalorder %s29, 0
    %p125 = por %p123, %p124
    %p126 = scmp.ne.s32.totalorder %s114, %s115
    %p127 = scmp.eq.s32.totalorder %s30, 5
    %p128 = por %p126, %p127
    %p130 = scmp.ne.s32.totalorder %s115, %s129
    %p131 = scmp.eq.s32.totalorder %s30, 0
    %p132 = por %p130, %p131
    %s133 = ssub.s32 %s32, %s39
    %p134 = scmp.eq.s32.totalorder %s133, 0
    %s136 = sadd.s32 %s135, 1
    %s137 = scalar_select %p134, %s135, %s136
    %p140 = pneg %p134
    %p141 = scmp.eq.s32.totalorder %s24, 5
    %p142 = por %p140, %p141
    %p143 = scmp.ne.s32.totalorder %s135, %s138
    %p144 = scmp.eq.s32.totalorder %s24, 0
    %p145 = por %p143, %p144
    %p146 = scmp.ne.s32.totalorder %s135, %s138
    %p147 = scmp.eq.s32.totalorder %s29, 5
    %p148 = por %p146, %p147
    %p149 = scmp.ne.s32.totalorder %s138, %s139
    %p150 = scmp.eq.s32.totalorder %s29, 0
    %p151 = por %p149, %p150
    %p152 = scmp.ne.s32.totalorder %s138, %s139
    %p153 = scmp.eq.s32.totalorder %s30, 5
    %p154 = por %p152, %p153
    %p156 = scmp.ne.s32.totalorder %s139, %s155
    %p157 = scmp.eq.s32.totalorder %s30, 0
    %p158 = por %p156, %p157
    %s159 = ssub.s32 %s32, %s39
    %p160 = scmp.eq.s32.totalorder %s159, 0
    %s162 = sadd.s32 %s161, 1
    %s163 = scalar_select %p160, %s161, %s162
    %p166 = pneg %p160
    %p167 = scmp.eq.s32.totalorder %s24, 5
    %p168 = por %p166, %p167
    %p169 = scmp.ne.s32.totalorder %s161, %s164
    %p170 = scmp.eq.s32.totalorder %s24, 0
    %p171 = por %p169, %p170
    %p172 = scmp.ne.s32.totalorder %s161, %s164
    %p173 = scmp.eq.s32.totalorder %s29, 5
    %p174 = por %p172, %p173
    %p175 = scmp.ne.s32.totalorder %s164, %s165
    %p176 = scmp.eq.s32.totalorder %s29, 0
    %p177 = por %p175, %p176
    %p178 = scmp.ne.s32.totalorder %s164, %s165
    %p179 = scmp.eq.s32.totalorder %s30, 5
    %p180 = por %p178, %p179
    %p182 = scmp.ne.s32.totalorder %s165, %s181
    %p183 = scmp.eq.s32.totalorder %s30, 0
    %p184 = por %p182, %p183
    %s185 = ssub.s32 %s32, %s39
    %p186 = scmp.eq.s32.totalorder %s185, 0
    %s188 = sadd.s32 %s187, 1
    %s189 = scalar_select %p186, %s187, %s188
    %p192 = pneg %p186
    %p193 = scmp.eq.s32.totalorder %s24, 5
    %p194 = por %p192, %p193
    %p195 = scmp.ne.s32.totalorder %s187, %s190
    %p196 = scmp.eq.s32.totalorder %s24, 0
    %p197 = por %p195, %p196
    %p198 = scmp.ne.s32.totalorder %s187, %s190
    %p199 = scmp.eq.s32.totalorder %s29, 5
    %p200 = por %p198, %p199
    %p201 = scmp.ne.s32.totalorder %s190, %s191
    %p202 = scmp.eq.s32.totalorder %s29, 0
    %p203 = por %p201, %p202
    %p204 = scmp.ne.s32.totalorder %s190, %s191
    %p205 = scmp.eq.s32.totalorder %s30, 5
    %p206 = por %p204, %p205
    %p208 = scmp.ne.s32.totalorder %s191, %s207
    %p209 = scmp.eq.s32.totalorder %s30, 0
    %p210 = por %p208, %p209
    %s211 = ssub.s32 %s32, %s39
    %p212 = scmp.eq.s32.totalorder %s211, 0
    %s214 = sadd.s32 %s213, 1
    %s215 = scalar_select %p212, %s213, %s214
    %p218 = pneg %p212
    %p219 = scmp.eq.s32.totalorder %s24, 5
    %p220 = por %p218, %p219
    %p221 = scmp.ne.s32.totalorder %s213, %s216
    %p222 = scmp.eq.s32.totalorder %s24, 0
    %p223 = por %p221, %p222
    %p224 = scmp.ne.s32.totalorder %s213, %s216
    %p225 = scmp.eq.s32.totalorder %s29, 5
    %p226 = por %p224, %p225
    %p227 = scmp.ne.s32.totalorder %s216, %s217
    %p228 = scmp.eq.s32.totalorder %s29, 0
    %p229 = por %p227, %p228
    %p230 = scmp.ne.s32.totalorder %s216, %s217
    %p231 = scmp.eq.s32.totalorder %s30, 5
    %p232 = por %p230, %p231
    %p234 = scmp.ne.s32.totalorder %s217, %s233
    %p235 = scmp.eq.s32.totalorder %s30, 0
    %p236 = por %p234, %p235
    %s237 = ssub.s32 %s32, %s39
    %p238 = scmp.eq.s32.totalorder %s237, 0
    %s240 = sadd.s32 %s239, 1
    %s241 = scalar_select %p238, %s239, %s240
    %p244 = pneg %p238
    %p245 = scmp.eq.s32.totalorder %s24, 5
    %p246 = por %p244, %p245
    %p247 = scmp.ne.s32.totalorder %s239, %s242
    %p248 = scmp.eq.s32.totalorder %s24, 0
    %p249 = por %p247, %p248
    %p250 = scmp.ne.s32.totalorder %s239, %s242
    %p251 = scmp.eq.s32.totalorder %s29, 5
    %p252 = por %p250, %p251
    %p253 = scmp.ne.s32.totalorder %s242, %s243
    %p254 = scmp.eq.s32.totalorder %s29, 0
    %p255 = por %p253, %p254
    %p256 = scmp.ne.s32.totalorder %s242, %s243
    %p257 = scmp.eq.s32.totalorder %s30, 5
    %p258 = por %p256, %p257
    %p260 = scmp.ne.s32.totalorder %s243, %s259
    %p261 = scmp.eq.s32.totalorder %s30, 0
    %p262 = por %p260, %p261
    %s263 = ssub.s32 %s32, %s39
    %p264 = scmp.eq.s32.totalorder %s263, 0
    %s266 = sadd.s32 %s265, 1
    %s267 = scalar_select %p264, %s265, %s266
    %p270 = pneg %p264
    %p271 = scmp.eq.s32.totalorder %s24, 5
    %p272 = por %p270, %p271
    %p273 = scmp.ne.s32.totalorder %s265, %s268
    %p274 = scmp.eq.s32.totalorder %s24, 0
    %p275 = por %p273, %p274
    %p276 = scmp.ne.s32.totalorder %s265, %s268
    %p277 = scmp.eq.s32.totalorder %s29, 5
    %p278 = por %p276, %p277
    %p279 = scmp.ne.s32.totalorder %s268, %s269
    %p280 = scmp.eq.s32.totalorder %s29, 0
    %p281 = por %p279, %p280
    %p282 = scmp.ne.s32.totalorder %s268, %s269
    %p283 = scmp.eq.s32.totalorder %s30, 5
    %p284 = por %p282, %p283
    %p286 = scmp.ne.s32.totalorder %s269, %s285
    %p287 = scmp.eq.s32.totalorder %s30, 0
    %p288 = por %p286, %p287
    %s289 = ssub.s32 %s32, %s39
    %p290 = scmp.eq.s32.totalorder %s289, 0
    %s292 = sadd.s32 %s291, 1
    %s293 = scalar_select %p290, %s291, %s292
    %p296 = pneg %p290
    %p297 = scmp.eq.s32.totalorder %s24, 5
    %p298 = por %p296, %p297
    %p299 = scmp.ne.s32.totalorder %s291, %s294
    %p300 = scmp.eq.s32.totalorder %s24, 0
    %p301 = por %p299, %p300
    %p302 = scmp.ne.s32.totalorder %s291, %s294
    %p303 = scmp.eq.s32.totalorder %s29, 5
    %p304 = por %p302, %p303
    %p305 = scmp.ne.s32.totalorder %s294, %s295
    %p306 = scmp.eq.s32.totalorder %s29, 0
    %p307 = por %p305, %p306
    %p308 = scmp.ne.s32.totalorder %s294, %s295
    %p309 = scmp.eq.s32.totalorder %s30, 5
    %p310 = por %p308, %p309
    %p312 = scmp.ne.s32.totalorder %s295, %s311
    %p313 = scmp.eq.s32.totalorder %s30, 0
    %p314 = por %p312, %p313
    %s315 = ssub.s32 %s32, %s39
    %p316 = scmp.eq.s32.totalorder %s315, 0
    %s318 = sadd.s32 %s317, 1
    %s319 = scalar_select %p316, %s317, %s318
    %p322 = pneg %p316
    %p323 = scmp.eq.s32.totalorder %s24, 5
    %p324 = por %p322, %p323
    %p325 = scmp.ne.s32.totalorder %s317, %s320
    %p326 = scmp.eq.s32.totalorder %s24, 0
    %p327 = por %p325, %p326
    %p328 = scmp.ne.s32.totalorder %s317, %s320
    %p329 = scmp.eq.s32.totalorder %s29, 5
    %p330 = por %p328, %p329
    %p331 = scmp.ne.s32.totalorder %s320, %s321
    %p332 = scmp.eq.s32.totalorder %s29, 0
    %p333 = por %p331, %p332
    %p334 = scmp.ne.s32.totalorder %s320, %s321
    %p335 = scmp.eq.s32.totalorder %s30, 5
    %p336 = por %p334, %p335
    %p338 = scmp.ne.s32.totalorder %s321, %s337
    %p339 = scmp.eq.s32.totalorder %s30, 0
    %p340 = por %p338, %p339
    %s341 = ssub.s32 %s32, %s39
    %p342 = scmp.eq.s32.totalorder %s341, 0
    %s344 = sadd.s32 %s343, 1
    %s345 = scalar_select %p342, %s343, %s344
    %p348 = pneg %p342
    %p349 = scmp.eq.s32.totalorder %s24, 5
    %p350 = por %p348, %p349
    %p351 = scmp.ne.s32.totalorder %s343, %s346
    %p352 = scmp.eq.s32.totalorder %s24, 0
    %p353 = por %p351, %p352
    %p354 = scmp.ne.s32.totalorder %s343, %s346
    %p355 = scmp.eq.s32.totalorder %s29, 5
    %p356 = por %p354, %p355
    %p357 = scmp.ne.s32.totalorder %s346, %s347
    %p358 = scmp.eq.s32.totalorder %s29, 0
    %p359 = por %p357, %p358
    %p360 = scmp.ne.s32.totalorder %s346, %s347
    %p361 = scmp.eq.s32.totalorder %s30, 5
    %p362 = por %p360, %p361
    %p364 = scmp.ne.s32.totalorder %s347, %s363
    %p365 = scmp.eq.s32.totalorder %s30, 0
    %p366 = por %p364, %p365
    %s367 = ssub.s32 %s32, %s39
    %p368 = scmp.eq.s32.totalorder %s367, 0
    %s370 = sadd.s32 %s369, 1
    %s371 = scalar_select %p368, %s369, %s370
    %p374 = pneg %p368
    %p375 = scmp.eq.s32.totalorder %s24, 5
    %p376 = por %p374, %p375
    %p377 = scmp.ne.s32.totalorder %s369, %s372
    %p378 = scmp.eq.s32.totalorder %s24, 0
    %p379 = por %p377, %p378
    %p380 = scmp.ne.s32.totalorder %s369, %s372
    %p381 = scmp.eq.s32.totalorder %s29, 5
    %p382 = por %p380, %p381
    %p383 = scmp.ne.s32.totalorder %s372, %s373
    %p384 = scmp.eq.s32.totalorder %s29, 0
    %p385 = por %p383, %p384
    %p386 = scmp.ne.s32.totalorder %s372, %s373
    %p387 = scmp.eq.s32.totalorder %s30, 5
    %p388 = por %p386, %p387
    %p390 = scmp.ne.s32.totalorder %s373, %s389
    %p391 = scmp.eq.s32.totalorder %s30, 0
    %p392 = por %p390, %p391
    %s393 = ssub.s32 %s32, %s39
    %p394 = scmp.eq.s32.totalorder %s393, 0
    %s396 = sadd.s32 %s395, 1
    %s397 = scalar_select %p394, %s395, %s396
    %p400 = pneg %p394
    %p401 = scmp.eq.s32.totalorder %s24, 5
    %p402 = por %p400, %p401
    %p403 = scmp.ne.s32.totalorder %s395, %s398
    %p404 = scmp.eq.s32.totalorder %s24, 0
    %p405 = por %p403, %p404
    %p406 = scmp.ne.s32.totalorder %s395, %s398
    %p407 = scmp.eq.s32.totalorder %s29, 5
    %p408 = por %p406, %p407
    %p409 = scmp.ne.s32.totalorder %s398, %s399
    %p410 = scmp.eq.s32.totalorder %s29, 0
    %p411 = por %p409, %p410
    %p412 = scmp.ne.s32.totalorder %s398, %s399
    %p413 = scmp.eq.s32.totalorder %s30, 5
    %p414 = por %p412, %p413
    %p416 = scmp.ne.s32.totalorder %s399, %s415
    %p417 = scmp.eq.s32.totalorder %s30, 0
    %p418 = por %p416, %p417
    %s419 = ssub.s32 %s32, %s39
    %p420 = scmp.eq.s32.totalorder %s419, 0
    %s422 = sadd.s32 %s421, 1
    %s423 = scalar_select %p420, %s421, %s422
    %p426 = pneg %p420
    %p427 = scmp.eq.s32.totalorder %s24, 5
    %p428 = por %p426, %p427
    %p429 = scmp.ne.s32.totalorder %s421, %s424
    %p430 = scmp.eq.s32.totalorder %s24, 0
    %p431 = por %p429, %p430
    %p432 = scmp.ne.s32.totalorder %s421, %s424
    %p433 = scmp.eq.s32.totalorder %s29, 5
    %p434 = por %p432, %p433
    %p435 = scmp.ne.s32.totalorder %s424, %s425
    %p436 = scmp.eq.s32.totalorder %s29, 0
    %p437 = por %p435, %p436
    %p438 = scmp.ne.s32.totalorder %s424, %s425
    %p439 = scmp.eq.s32.totalorder %s30, 5
    %p440 = por %p438, %p439
    %p442 = scmp.ne.s32.totalorder %s425, %s441
    %p443 = scmp.eq.s32.totalorder %s30, 0
    %p444 = por %p442, %p443
    %s446 = sadd.s32 %s445, 1
    %p449 = scmp.eq.s32.totalorder %s24, 5
    %p450 = scmp.ne.s32.totalorder %s445, %s447
    %p451 = scmp.eq.s32.totalorder %s24, 0
    %p452 = por %p450, %p451
    %p453 = scmp.ne.s32.totalorder %s445, %s447
    %p454 = scmp.eq.s32.totalorder %s29, 5
    %p455 = por %p453, %p454
    %p456 = scmp.ne.s32.totalorder %s447, %s448
    %p457 = scmp.eq.s32.totalorder %s29, 0
    %p458 = por %p456, %p457
    %p459 = scmp.ne.s32.totalorder %s447, %s448
    %p460 = scmp.eq.s32.totalorder %s30, 5
    %p461 = por %p459, %p460
    %p463 = scmp.ne.s32.totalorder %s448, %s462
    %p464 = scmp.eq.s32.totalorder %s30, 0
    %p465 = por %p463, %p464
    %s467 = sadd.s32 %s466, 1
    %p470 = scmp.eq.s32.totalorder %s24, 5
    %p471 = scmp.ne.s32.totalorder %s466, %s468
    %p472 = scmp.eq.s32.totalorder %s24, 0
    %p473 = por %p471, %p472
    %p474 = scmp.ne.s32.totalorder %s466, %s468
    %p475 = scmp.eq.s32.totalorder %s29, 5
    %p476 = por %p474, %p475
    %p477 = scmp.ne.s32.totalorder %s468, %s469
    %p478 = scmp.eq.s32.totalorder %s29, 0
    %p479 = por %p477, %p478
    %p480 = scmp.ne.s32.totalorder %s468, %s469
    %p481 = scmp.eq.s32.totalorder %s30, 5
    %p482 = por %p480, %p481
    %p484 = scmp.ne.s32.totalorder %s469, %s483
    %p485 = scmp.eq.s32.totalorder %s30, 0
    %p486 = por %p484, %p485
    %s487 = ssub.s32 %s32, 1
    %p488 = scmp.gt.s32.totalorder %s487, 0
    %s489 = scalar_select %p488, %s487, 0
    %s490 = ssub.s32 %s39, 1
    %p491 = scmp.gt.s32.totalorder %s490, 0
    %s492 = scalar_select %p491, %s490, 0
    %s493 = ssub.s32 %s489, %s492
    %s494 = ssub.s32 %s31, %s43
    %s495 = sor.u32 %s493, %s494
    %p496 = scmp.eq.s32.totalorder %s495, 0
    %s498 = sadd.s32 %s497, 1
    %s499 = scalar_select %p496, %s497, %s498
    %p502 = pneg %p496
    %p503 = scmp.eq.s32.totalorder %s24, 5
    %p504 = por %p502, %p503
    %p505 = scmp.ne.s32.totalorder %s497, %s500
    %p506 = scmp.eq.s32.totalorder %s24, 0
    %p507 = por %p505, %p506
    %p508 = scmp.ne.s32.totalorder %s497, %s500
    %p509 = scmp.eq.s32.totalorder %s29, 5
    %p510 = por %p508, %p509
    %p511 = scmp.ne.s32.totalorder %s500, %s501
    %p512 = scmp.eq.s32.totalorder %s29, 0
    %p513 = por %p511, %p512
    %p514 = scmp.ne.s32.totalorder %s500, %s501
    %p515 = scmp.eq.s32.totalorder %s30, 5
    %p516 = por %p514, %p515
    %p518 = scmp.ne.s32.totalorder %s501, %s517
    %p519 = scmp.eq.s32.totalorder %s30, 0
    %p520 = por %p518, %p519
    %p521 = scmp.le.s32.totalorder 1, %s24
    %p522 = scmp.lt.s32.totalorder %s24, 7
    %p523 = pnand %p521, %p522
    %p524 = pneg %p523
    // Predicated region
    $region9: #{get_intermediate_layers.1} parent=5 // pred_check
      _
    $region10: #{get_intermediate_layers.1} parent=5 // pred_check_branch
      %526 = sbr.rel (%p523) target = $region12
    $region11: #{get_intermediate_layers.1} parent=5 // pred_region
      %s527 = ssub.s32 %s24, 1
      // Predicated region
      $region13: #{get_intermediate_layers.1} parent=11 // pred_check
        %p528 = pneg %p83
      $region14: #{get_intermediate_layers.1} parent=11 // pred_check_branch
        %530 = sbr.rel (%p528) target = $region16
      $region15: #{get_intermediate_layers.1} parent=11 // pred_region
        _
      $region16: #{get_intermediate_layers.1} parent=11 // pred_fallthru
        _
      // Predicated region
      $region17: #{get_intermediate_layers.1} parent=11 // pred_check
        %p531 = pneg %p104
      $region18: #{get_intermediate_layers.1} parent=11 // pred_check_branch
        %533 = sbr.rel (%p531) target = $region20
      $region19: #{get_intermediate_layers.1} parent=11 // pred_region
        _
      $region20: #{get_intermediate_layers.1} parent=11 // pred_fallthru
        _
      // Predicated region
      $region21: #{get_intermediate_layers.1} parent=11 // pred_check
        %p534 = pneg %p125
      $region22: #{get_intermediate_layers.1} parent=11 // pred_check_branch
        %536 = sbr.rel (%p534) target = $region24
      $region23: #{get_intermediate_layers.1} parent=11 // pred_region
        _
      $region24: #{get_intermediate_layers.1} parent=11 // pred_fallthru
        _
      // Predicated region
      $region25: #{get_intermediate_layers.1} parent=11 // pred_check
        %p537 = pneg %p458
      $region26: #{get_intermediate_layers.1} parent=11 // pred_check_branch
        %539 = sbr.rel (%p537) target = $region28
      $region27: #{get_intermediate_layers.1} parent=11 // pred_region
        _
      $region28: #{get_intermediate_layers.1} parent=11 // pred_fallthru
        _
      // Predicated region
      $region29: #{get_intermediate_layers.1} parent=11 // pred_check
        %p540 = pneg %p479
      $region30: #{get_intermediate_layers.1} parent=11 // pred_check_branch
        %542 = sbr.rel (%p540) target = $region32
      $region31: #{get_intermediate_layers.1} parent=11 // pred_region
        _
      $region32: #{get_intermediate_layers.1} parent=11 // pred_fallthru
        _
    $region12: #{get_intermediate_layers.1} parent=5 // pred_fallthru
      _
    %p543 = scmp.lt.s32.totalorder %s24, 6
    // Predicated region
    $region33: #{get_intermediate_layers.1} parent=5 // pred_check
      %p544 = pneg %p543
    $region34: #{get_intermediate_layers.1} parent=5 // pred_check_branch
      %546 = sbr.rel (%p544) target = $region36
    $region35: #{get_intermediate_layers.1} parent=5 // pred_region
      // Predicated region
      $region37: #{get_intermediate_layers.1} parent=35 // pred_check
        %p547 = pneg %p56
      $region38: #{get_intermediate_layers.1} parent=35 // pred_check_branch
        %549 = sbr.rel (%p547) target = $region40
      $region39: #{get_intermediate_layers.1} parent=35 // pred_region
        %s550 = smul.u32 3, %s31
        %p551 = scmp.lt.s32.totalorder %s550, 5
        %s552 = scalar_select %p551, %s550, 5
        %s553 = smul.addr %s552, 4
        %s554 = scalar_lea.vmem %s0, %s553
        %s555 = smul.u32 3, %s31
      $region40: #{get_intermediate_layers.1} parent=35 // pred_fallthru
        _
      // Predicated region
      $region41: #{get_intermediate_layers.1} parent=35 // pred_check
        %p556 = pneg %p145
      $region42: #{get_intermediate_layers.1} parent=35 // pred_check_branch
        %558 = sbr.rel (%p556) target = $region44
      $region43: #{get_intermediate_layers.1} parent=35 // pred_region
        %p559 = scmp.lt.s32.totalorder %s32, 2
        %s560 = scalar_select %p559, %s32, 2
        %s561 = scalar_lea.vmem %s4, %s560
      $region44: #{get_intermediate_layers.1} parent=35 // pred_fallthru
        _
      // Predicated region
      $region45: #{get_intermediate_layers.1} parent=35 // pred_check
        %p562 = pneg %p171
      $region46: #{get_intermediate_layers.1} parent=35 // pred_check_branch
        %564 = sbr.rel (%p562) target = $region48
      $region47: #{get_intermediate_layers.1} parent=35 // pred_region
        %p565 = scmp.lt.s32.totalorder %s32, 2
        %s566 = scalar_select %p565, %s32, 2
        %s567 = scalar_lea.vmem %s5, %s566
      $region48: #{get_intermediate_layers.1} parent=35 // pred_fallthru
        _
      // Predicated region
      $region49: #{get_intermediate_layers.1} parent=35 // pred_check
        %p568 = pneg %p197
      $region50: #{get_intermediate_layers.1} parent=35 // pred_check_branch
        %570 = sbr.rel (%p568) target = $region52
      $region51: #{get_intermediate_layers.1} parent=35 // pred_region
        %p571 = scmp.lt.s32.totalorder %s32, 2
        %s572 = scalar_select %p571, %s32, 2
        %s573 = smul.addr %s572, 4
        %s574 = smul.addr %s573, 4
        %s575 = scalar_lea.vmem %s6, %s574
      $region52: #{get_intermediate_layers.1} parent=35 // pred_fallthru
        _
      // Predicated region
      $region53: #{get_intermediate_layers.1} parent=35 // pred_check
        %p576 = pneg %p223
      $region54: #{get_intermediate_layers.1} parent=35 // pred_check_branch
        %578 = sbr.rel (%p576) target = $region56
      $region55: #{get_intermediate_layers.1} parent=35 // pred_region
        %p579 = scmp.lt.s32.totalorder %s32, 2
        %s580 = scalar_select %p579, %s32, 2
        %s581 = scalar_lea.vmem %s7, %s580
      $region56: #{get_intermediate_layers.1} parent=35 // pred_fallthru
        _
      // Predicated region
      $region57: #{get_intermediate_layers.1} parent=35 // pred_check
        %p582 = pneg %p249
      $region58: #{get_intermediate_layers.1} parent=35 // pred_check_branch
        %584 = sbr.rel (%p582) target = $region60
      $region59: #{get_intermediate_layers.1} parent=35 // pred_region
        %p585 = scmp.lt.s32.totalorder %s32, 2
        %s586 = scalar_select %p585, %s32, 2
        %s587 = smul.addr %s586, 4
        %s588 = smul.addr %s587, 4
        %s589 = scalar_lea.vmem %s8, %s588
      $region60: #{get_intermediate_layers.1} parent=35 // pred_fallthru
        _
      // Predicated region
      $region61: #{get_intermediate_layers.1} parent=35 // pred_check
        %p590 = pneg %p275
      $region62: #{get_intermediate_layers.1} parent=35 // pred_check_branch
        %592 = sbr.rel (%p590) target = $region64
      $region63: #{get_intermediate_layers.1} parent=35 // pred_region
        %p593 = scmp.lt.s32.totalorder %s32, 2
        %s594 = scalar_select %p593, %s32, 2
        %s595 = scalar_lea.vmem %s9, %s594
      $region64: #{get_intermediate_layers.1} parent=35 // pred_fallthru
        _
      // Predicated region
      $region65: #{get_intermediate_layers.1} parent=35 // pred_check
        %p596 = pneg %p301
      $region66: #{get_intermediate_layers.1} parent=35 // pred_check_branch
        %598 = sbr.rel (%p596) target = $region68
      $region67: #{get_intermediate_layers.1} parent=35 // pred_region
        %p599 = scmp.lt.s32.totalorder %s32, 2
        %s600 = scalar_select %p599, %s32, 2
        %s601 = scalar_lea.vmem %s10, %s600
      $region68: #{get_intermediate_layers.1} parent=35 // pred_fallthru
        _
      // Predicated region
      $region69: #{get_intermediate_layers.1} parent=35 // pred_check
        %p602 = pneg %p327
      $region70: #{get_intermediate_layers.1} parent=35 // pred_check_branch
        %604 = sbr.rel (%p602) target = $region72
      $region71: #{get_intermediate_layers.1} parent=35 // pred_region
        %p605 = scmp.lt.s32.totalorder %s32, 2
        %s606 = scalar_select %p605, %s32, 2
        %s607 = scalar_lea.vmem %s11, %s606
      $region72: #{get_intermediate_layers.1} parent=35 // pred_fallthru
        _
      // Predicated region
      $region73: #{get_intermediate_layers.1} parent=35 // pred_check
        %p608 = pneg %p353
      $region74: #{get_intermediate_layers.1} parent=35 // pred_check_branch
        %610 = sbr.rel (%p608) target = $region76
      $region75: #{get_intermediate_layers.1} parent=35 // pred_region
        %p611 = scmp.lt.s32.totalorder %s32, 2
        %s612 = scalar_select %p611, %s32, 2
        %s613 = smul.addr %s612, 4
        %s614 = smul.addr %s613, 4
        %s615 = scalar_lea.vmem %s12, %s614
      $region76: #{get_intermediate_layers.1} parent=35 // pred_fallthru
        _
      // Predicated region
      $region77: #{get_intermediate_layers.1} parent=35 // pred_check
        %p616 = pneg %p379
      $region78: #{get_intermediate_layers.1} parent=35 // pred_check_branch
        %618 = sbr.rel (%p616) target = $region80
      $region79: #{get_intermediate_layers.1} parent=35 // pred_region
        %p619 = scmp.lt.s32.totalorder %s32, 2
        %s620 = scalar_select %p619, %s32, 2
        %s621 = scalar_lea.vmem %s13, %s620
      $region80: #{get_intermediate_layers.1} parent=35 // pred_fallthru
        _
      // Predicated region
      $region81: #{get_intermediate_layers.1} parent=35 // pred_check
        %p622 = pneg %p405
      $region82: #{get_intermediate_layers.1} parent=35 // pred_check_branch
        %624 = sbr.rel (%p622) target = $region84
      $region83: #{get_intermediate_layers.1} parent=35 // pred_region
        %p625 = scmp.lt.s32.totalorder %s32, 2
        %s626 = scalar_select %p625, %s32, 2
        %s627 = smul.addr %s626, 16
        %s628 = smul.addr %s627, 4
        %s629 = scalar_lea.vmem %s14, %s628
      $region84: #{get_intermediate_layers.1} parent=35 // pred_fallthru
        _
      // Predicated region
      $region85: #{get_intermediate_layers.1} parent=35 // pred_check
        %p630 = pneg %p431
      $region86: #{get_intermediate_layers.1} parent=35 // pred_check_branch
        %632 = sbr.rel (%p630) target = $region88
      $region87: #{get_intermediate_layers.1} parent=35 // pred_region
        %p633 = scmp.lt.s32.totalorder %s32, 2
        %s634 = scalar_select %p633, %s32, 2
        %s635 = scalar_lea.vmem %s15, %s634
      $region88: #{get_intermediate_layers.1} parent=35 // pred_fallthru
        _
    $region36: #{get_intermediate_layers.1} parent=5 // pred_fallthru
      _
    %p636 = scmp.le.s32.totalorder 1, %s24
    %p637 = scmp.lt.s32.totalorder %s24, 7
    %p638 = pnand %p636, %p637
    %p639 = pneg %p638
    // Predicated region
    $region89: #{get_intermediate_layers.1} parent=5 // pred_check
      _
    $region90: #{get_intermediate_layers.1} parent=5 // pred_check_branch
      %641 = sbr.rel (%p638) target = $region92
    $region91: #{get_intermediate_layers.1} parent=5 // pred_region
      %s642 = ssub.s32 %s24, 1
      %s643 = smul.u32 3, %s33
      %p644 = scmp.lt.s32.totalorder %s643, 5
      %s645 = scalar_select %p644, %s643, 5
      %s646 = smul.addr %s645, 4
      %s647 = scalar_lea.vmem %s0, %s646
      %p648 = pneg %p62
      %p649 = pneg %p59
      %p650 = pneg %p83
      %p651 = pneg %p80
      %p652 = pneg %p104
      %p653 = pneg %p101
      %p654 = pneg %p125
      %p655 = pneg %p122
      %p656 = scmp.lt.s32.totalorder %s34, 2
      %s657 = scalar_select %p656, %s34, 2
      %s658 = scalar_lea.vmem %s4, %s657
      %p659 = pneg %p151
      %p660 = pneg %p148
      %p661 = scmp.lt.s32.totalorder %s34, 2
      %s662 = scalar_select %p661, %s34, 2
      %s663 = scalar_lea.vmem %s5, %s662
      %p664 = pneg %p177
      %p665 = pneg %p174
      %p666 = scmp.lt.s32.totalorder %s34, 2
      %s667 = scalar_select %p666, %s34, 2
      %s668 = smul.addr %s667, 4
      %s669 = smul.addr %s668, 4
      %s670 = scalar_lea.vmem %s6, %s669
      %p671 = pneg %p203
      %p672 = pneg %p200
      %p673 = scmp.lt.s32.totalorder %s34, 2
      %s674 = scalar_select %p673, %s34, 2
      %s675 = scalar_lea.vmem %s7, %s674
      %p676 = pneg %p229
      %p677 = pneg %p226
      %p678 = scmp.lt.s32.totalorder %s34, 2
      %s679 = scalar_select %p678, %s34, 2
      %s680 = smul.addr %s679, 4
      %s681 = smul.addr %s680, 4
      %s682 = scalar_lea.vmem %s8, %s681
      %p683 = pneg %p255
      %p684 = pneg %p252
      %p685 = scmp.lt.s32.totalorder %s34, 2
      %s686 = scalar_select %p685, %s34, 2
      %s687 = scalar_lea.vmem %s9, %s686
      %p688 = pneg %p281
      %p689 = pneg %p278
      %p690 = scmp.lt.s32.totalorder %s34, 2
      %s691 = scalar_select %p690, %s34, 2
      %s692 = scalar_lea.vmem %s10, %s691
      %p693 = pneg %p307
      %p694 = pneg %p304
      %p695 = scmp.lt.s32.totalorder %s34, 2
      %s696 = scalar_select %p695, %s34, 2
      %s697 = scalar_lea.vmem %s11, %s696
      %p698 = pneg %p333
      %p699 = pneg %p330
      %p700 = scmp.lt.s32.totalorder %s34, 2
      %s701 = scalar_select %p700, %s34, 2
      %s702 = smul.addr %s701, 4
      %s703 = smul.addr %s702, 4
      %s704 = scalar_lea.vmem %s12, %s703
      %p705 = pneg %p359
      %p706 = pneg %p356
      %p707 = scmp.lt.s32.totalorder %s34, 2
      %s708 = scalar_select %p707, %s34, 2
      %s709 = scalar_lea.vmem %s13, %s708
      %p710 = pneg %p385
      %p711 = pneg %p382
      %p712 = scmp.lt.s32.totalorder %s34, 2
      %s713 = scalar_select %p712, %s34, 2
      %s714 = smul.addr %s713, 16
      %s715 = smul.addr %s714, 4
      %s716 = scalar_lea.vmem %s14, %s715
      %p717 = pneg %p411
      %p718 = pneg %p408
      %p719 = scmp.lt.s32.totalorder %s34, 2
      %s720 = scalar_select %p719, %s34, 2
      %s721 = scalar_lea.vmem %s15, %s720
      %p722 = pneg %p437
      %p723 = pneg %p434
      %p724 = pneg %p458
      %p725 = pneg %p455
      %p726 = pneg %p479
      %p727 = pneg %p476
      %p728 = pneg %p513
      %p729 = pneg %p510
      %s730 = ssub.s32 %s34, 1
      %p731 = scmp.gt.s32.totalorder %s730, 0
      %s732 = scalar_select %p731, %s730, 0
      %s733 = smul.u32 3, %s33
      %p734 = scmp.lt.s32.totalorder %s732, 1
      %s735 = scalar_select %p734, %s732, 1
      %p736 = scmp.lt.s32.totalorder %s733, 5
      %s737 = scalar_select %p736, %s733, 5
      %s738 = smul.addr %s735, 6
      %s739 = sadd.s32 %s737, %s738
      %s740 = smul.addr %s739, 8
      %s741 = scalar_lea.vmem %s18, %s740
      %s742 = smul.u32 3, %s33
      %p743 = scmp.lt.s32.totalorder %s742, 5
      %s744 = scalar_select %p743, %s742, 5
      %s745 = smul.addr %s744, 4
      %s746 = scalar_lea.vmem %s0, %s745
      %s747 = smul.u32 3, %s33
      %p748 = scmp.lt.s32.totalorder %s34, 2
      %s749 = scalar_select %p748, %s34, 2
      %s750 = scalar_lea.vmem %s4, %s749
      %p751 = scmp.lt.s32.totalorder %s34, 2
      %s752 = scalar_select %p751, %s34, 2
      %s753 = scalar_lea.vmem %s5, %s752
      %p754 = scmp.lt.s32.totalorder %s34, 2
      %s755 = scalar_select %p754, %s34, 2
      %s756 = smul.addr %s755, 4
      %s757 = smul.addr %s756, 4
      %s758 = scalar_lea.vmem %s6, %s757
      %p759 = scmp.lt.s32.totalorder %s34, 2
      %s760 = scalar_select %p759, %s34, 2
      %s761 = scalar_lea.vmem %s7, %s760
      %p762 = scmp.lt.s32.totalorder %s34, 2
      %s763 = scalar_select %p762, %s34, 2
      %s764 = smul.addr %s763, 4
      %s765 = smul.addr %s764, 4
      %s766 = scalar_lea.vmem %s8, %s765
      %p767 = scmp.lt.s32.totalorder %s34, 2
      %s768 = scalar_select %p767, %s34, 2
      %s769 = scalar_lea.vmem %s9, %s768
      %p770 = scmp.lt.s32.totalorder %s34, 2
      %s771 = scalar_select %p770, %s34, 2
      %s772 = scalar_lea.vmem %s10, %s771
      %p773 = scmp.lt.s32.totalorder %s34, 2
      %s774 = scalar_select %p773, %s34, 2
      %s775 = scalar_lea.vmem %s11, %s774
      %p776 = scmp.lt.s32.totalorder %s34, 2
      %s777 = scalar_select %p776, %s34, 2
      %s778 = smul.addr %s777, 4
      %s779 = smul.addr %s778, 4
      %s780 = scalar_lea.vmem %s12, %s779
      %p781 = scmp.lt.s32.totalorder %s34, 2
      %s782 = scalar_select %p781, %s34, 2
      %s783 = scalar_lea.vmem %s13, %s782
      %p784 = scmp.lt.s32.totalorder %s34, 2
      %s785 = scalar_select %p784, %s34, 2
      %s786 = smul.addr %s785, 16
      %s787 = smul.addr %s786, 4
      %s788 = scalar_lea.vmem %s14, %s787
      %p789 = scmp.lt.s32.totalorder %s34, 2
      %s790 = scalar_select %p789, %s34, 2
      %s791 = scalar_lea.vmem %s15, %s790
      %s792 = ssub.s32 %s34, 1
      %p793 = scmp.gt.s32.totalorder %s792, 0
      %s794 = scalar_select %p793, %s792, 0
      %s795 = smul.u32 3, %s33
      %p796 = scmp.lt.s32.totalorder %s794, 1
      %s797 = scalar_select %p796, %s794, 1
      %p798 = scmp.lt.s32.totalorder %s795, 5
      %s799 = scalar_select %p798, %s795, 5
      %s800 = smul.addr %s797, 6
      %s801 = sadd.s32 %s799, %s800
      %s802 = smul.addr %s801, 8
      %s803 = scalar_lea.vmem %s18, %s802
      %s804 = ssub.s32 %s34, 1
      %p805 = scmp.gt.s32.totalorder %s804, 0
      %s806 = scalar_select %p805, %s804, 0
      %s807 = smul.u32 3, %s33
      %p809 = scmp.eq.s32.totalorder %s34, 0
      // Predicated region
      $region93: #{get_intermediate_layers.1} parent=91 // pred_check
        %p810 = pneg %p809
      $region94: #{get_intermediate_layers.1} parent=91 // pred_check_branch
        %812 = sbr.rel (%p810) target = $region96
      $region95: #{get_intermediate_layers.1} parent=91 // pred_region
        %v813 = vld [vmem:[%s746] sm:$0xf]
        %v814 = vld [vmem:[%s746 + $0x4] sm:$0xf]
        %v815 = vld [vmem:[%s746 + $0x8] sm:$0xf]
        %v816 = vld [vmem:[%s1] sm:$0xf]
        %v817 = vld [vmem:[%s1 + $0x4] sm:$0xf]
        %v818 = vld [vmem:[%s1 + $0x8] sm:$0xf]
        %v819 = vld [vmem:[%s1 + $0xc] sm:$0xf]
        %v820 = vld [vmem:[%s1 + $0x10] sm:$0xf]
        %v821 = vld [vmem:[%s1 + $0x14] sm:$0xf]
        %v822 = vld [vmem:[%s2] sm:$0xff]
        %v823 = vld [vmem:[%s2 + $0x8] sm:$0xff]
        %v824 = vld [vmem:[%s2 + $0x10] sm:$0xff]
        %v828 = vunpack.c.l.b16 %v813
        %v829 = vunpack.c.l.b16 %v814
        %v830 = vunpack.c.l.b16 %v815
        %v831 = vpack.c.b16 %v829, %v828
        %v832 = vpack.c.b16 %v830, %v830
        %v839 = vunpack.c.l.b16 %v816
        %v840 = vunpack.c.l.b16 %v817
        %v841 = vunpack.c.l.b16 %v818
        %v842 = vunpack.c.l.b16 %v819
        %v843 = vunpack.c.l.b16 %v820
        %v844 = vunpack.c.l.b16 %v821
        %v845 = vpack.c.b16 %v840, %v839
        %v846 = vpack.c.b16 %v842, %v841
        %v847 = vpack.c.b16 %v844, %v843
        %vm851 = vcmask 392192
        %v853 = vsel %vm851, %v831, 0
        %v856 = vsel %vm851, %v832, 0
        %858 = vmatpush.bf16.msra.mxu0 0
        %859 = vmatpush.bf16.msra.mxu0 0
        %860 = vmatpush.bf16.msra.mxu0 0
        %861 = vmatpush.bf16.msra.mxu0 0
        %862 = vmatpush.bf16.msra.mxu0 0
        %863 = vmatpush.bf16.msra.mxu0 %v847
        %864 = vmatpush.bf16.msra.mxu0 %v846
        %865 = vmatpush.bf16.msra.mxu0 %v845
        %866 = vmatmul.bf16.gmra.mxu0 %v853
        %v867 = vpop.f32.mrf.mxu0
        %v868 = vadd.f32 %v822, %v867
        %v869 = vpop.f32.mrf.mxu0
        %v870 = vadd.f32 %v823, %v869
        %871 = vmatmul.bf16.gmra.mxu0 %v856
        %v872 = vpop.f32.mrf.mxu0
        %v873 = vadd.f32 %v824, %v872
        %v874 = vpop.f32.mrf.mxu0
        %875 = vdwg.mxu0
        %vm876 = vcmask 261120
        %877 = vst.msk [vmem:[#allocation2] sm:$0xff] %vm876, %v868
        %878 = vst.msk [vmem:[#allocation2 + $0x8] sm:$0xff] %vm876, %v870
        %879 = vst.msk [vmem:[#allocation2 + $0x10] sm:$0xff] %vm876, %v873
      $region96: #{get_intermediate_layers.1} parent=91 // pred_fallthru
        _
      %v880 = vld [vmem:[#allocation2] sm:$0xff]
      %v881 = vld [vmem:[#allocation2 + $0x8] sm:$0xff]
      %v882 = vld [vmem:[#allocation2 + $0x10] sm:$0xff]
      %v883 = vld [vmem:[%s3] sm:$0x1]
      %v884 = vld [vmem:[%s750] sm:$0x1]
      %v885 = vld [vmem:[%s753] sm:$0x1]
      %vm886 = vcmask 261120
      %v887 = vsel %vm886, %v880, 0.0
      %888 = vadd.xlane.f32.xlu0 %v887
      %v889 = vpop.xlane.xlu0 %888
      %v890 = vsel %vm886, %v881, 0.0
      %891 = vadd.xlane.f32.xlu0 %v890
      %v892 = vpop.xlane.xlu0 %891
      %v893 = vsel %vm886, %v882, 0.0
      %894 = vadd.xlane.f32.xlu0 %v893
      %v895 = vpop.xlane.xlu0 %894
      %v896 = vrcp.pop 32.0
      %v897 = vmul.f32 32.0, %v896
      %v898 = vsub.f32 1.0, %v897
      %v899 = vmul.f32 %v896, %v898
      %v900 = vadd.f32 %v896, %v899
      %vm901 = vweird.f32 %v896
      %v902 = vsel %vm901, %v896, %v900
      %v903 = vmul.f32 %v889, %v902
      %v904 = vmul.f32 %v892, %v902
      %v905 = vmul.f32 %v895, %v902
      %v906 = vsub.f32 %v880, %v903
      %v907 = vsub.f32 %v881, %v904
      %v908 = vsub.f32 %v882, %v905
      %v909 = vmul.f32 %v906, %v906
      %v910 = vmul.f32 %v907, %v907
      %v911 = vmul.f32 %v908, %v908
      %v912 = vsel %vm886, %v909, 0.0
      %913 = vadd.xlane.f32.xlu0 %v912
      %v914 = vpop.xlane.xlu0 %913
      %v915 = vsel %vm886, %v910, 0.0
      %916 = vadd.xlane.f32.xlu0 %v915
      %v917 = vpop.xlane.xlu0 %916
      %v918 = vsel %vm886, %v911, 0.0
      %919 = vadd.xlane.f32.xlu0 %v918
      %v920 = vpop.xlane.xlu0 %919
      %v921 = vmul.f32 %v914, %v902
      %v922 = vmul.f32 %v917, %v902
      %v923 = vmul.f32 %v920, %v902
      %v924 = vadd.f32 %v921, 1e-06
      %v925 = vadd.f32 %v922, 1e-06
      %v926 = vadd.f32 %v923, 1e-06
      %v927 = vrsqrt.pop %v924
      %v928 = vmul.f32 %v927, %v924
      %v929 = vmul.f32 %v928, %v927
      %v930 = vmul.f32 0.5, %v929
      %v931 = vsub.f32 1.5, %v930
      %v932 = vmul.f32 %v927, %v931
      %vm933 = vweird.f32 %v924
      %vm934 = vweird.f32 %v927
      %vm935 = vmor %vm933, %vm934
      %v936 = vsel %vm935, %v927, %v932
      %v937 = vrsqrt.pop %v925
      %v938 = vmul.f32 %v937, %v925
      %v939 = vmul.f32 %v938, %v937
      %v940 = vmul.f32 0.5, %v939
      %v941 = vsub.f32 1.5, %v940
      %v942 = vmul.f32 %v937, %v941
      %vm943 = vweird.f32 %v925
      %vm944 = vweird.f32 %v937
      %vm945 = vmor %vm943, %vm944
      %v946 = vsel %vm945, %v937, %v942
      %v947 = vrsqrt.pop %v926
      %v948 = vmul.f32 %v947, %v926
      %v949 = vmul.f32 %v948, %v947
      %v950 = vmul.f32 0.5, %v949
      %v951 = vsub.f32 1.5, %v950
      %v952 = vmul.f32 %v947, %v951
      %vm953 = vweird.f32 %v926
      %vm954 = vweird.f32 %v947
      %vm955 = vmor %vm953, %vm954
      %v956 = vsel %vm955, %v947, %v952
      %v957 = vmul.f32 %v906, %v936
      %v958 = vmul.f32 %v907, %v946
      %v959 = vmul.f32 %v908, %v956
      %v961 = vperm.slane %v884, 0
      %v963 = vmul.f32 %v957, %v961
      %v964 = vmul.f32 %v958, %v961
      %v965 = vmul.f32 %v959, %v961
      %v967 = vperm.slane %v885, 0
      %v969 = vadd.f32 %v963, %v967
      %v970 = vadd.f32 %v964, %v967
      %v971 = vadd.f32 %v965, %v967
      %v972 = vpack.c.bf16 %v970, %v969
      %v973 = vpack.c.bf16 %v971, %v971
      %v974 = vld [vmem:[%s758] sm:$0xf]
      %v975 = vld [vmem:[%s758 + $0x4] sm:$0xf]
      %v976 = vld [vmem:[%s758 + $0x8] sm:$0xf]
      %v977 = vld [vmem:[%s758 + $0xc] sm:$0xf]
      %v978 = vld [vmem:[%s761] sm:$0x1]
      %v980 = vperm.slane %v978, 0
      %v986 = vunpack.c.l.b16 %v974
      %v987 = vunpack.c.l.b16 %v975
      %v988 = vunpack.c.l.b16 %v976
      %v989 = vunpack.c.l.b16 %v977
      %v990 = vpack.c.b16 %v987, %v986
      %v991 = vpack.c.b16 %v989, %v988
      %v995 = vsel %vm886, %v972, 0
      %v998 = vsel %vm886, %v973, 0
      %1000 = vmatpush.bf16.msra.mxu0 0
      %1001 = vmatpush.bf16.msra.mxu0 0
      %1002 = vmatpush.bf16.msra.mxu0 0
      %1003 = vmatpush.bf16.msra.mxu0 0
      %1004 = vmatpush.bf16.msra.mxu0 0
      %1005 = vmatpush.bf16.msra.mxu0 0
      %1006 = vmatpush.bf16.msra.mxu0 %v991
      %1007 = vmatpush.bf16.msra.mxu0 %v990
      %1008 = vmatmul.bf16.gmra.mxu0 %v995
      %v1009 = vpop.f32.mrf.mxu0
      %v1010 = vadd.f32 %v980, %v1009
      %v1011 = vpop.f32.mrf.mxu0
      %v1012 = vadd.f32 %v980, %v1011
      %1013 = vmatmul.bf16.gmra.mxu0 %v998
      %v1014 = vpop.f32.mrf.mxu0
      %v1015 = vadd.f32 %v980, %v1014
      %v1016 = vpop.f32.mrf.mxu0
      %1017 = vdwg.mxu0
      %v1018 = vmul.f32 %v1010, 0.25
      %v1019 = vmul.f32 %v1012, 0.25
      %v1020 = vmul.f32 %v1015, 0.25
      %v1021 = vpack.c.bf16 %v1018, %v1018
      %v1022 = vpack.c.bf16 %v1019, %v1019
      %v1023 = vpack.c.bf16 %v1020, %v1020
      %v1024 = vpack.c.bf16 %v1010, %v1010
      %v1025 = vpack.c.bf16 %v1012, %v1012
      %v1026 = vpack.c.bf16 %v1015, %v1015
      %v1028 = vperm.slane %v883, 0
      %v1033 = vunpack.c.l.b16 %v1021
      %v1034 = vunpack.c.l.b16 %v1022
      %v1035 = vunpack.c.l.b16 %v1023
      %v1036 = vpack.c.b16 %v1034, %v1033
      %v1037 = vpack.c.b16 %v1035, %v1035
      %v1041 = vunpack.c.l.b16 %v1024
      %v1042 = vunpack.c.l.b16 %v1025
      %v1043 = vunpack.c.l.b16 %v1026
      %v1044 = vpack.c.b16 %v1042, %v1041
      %v1045 = vpack.c.b16 %v1043, %v1043
      %1046 = vrot.lane.b32.xlu0 %v1044, 96
      %v1047 = vpop.permute.xlu0 %1046
      %1048 = vrot.lane.b32.xlu0 %v1045, 96
      %v1049 = vpop.permute.xlu0 %1048
      %vm1050 = vcmask 130048
      %v1052 = vsel %vm1050, %v1036, 0
      %v1055 = vsel %vm1050, %v1037, 0
      %v1058 = vsel %vm1050, %v1047, 0
      %v1061 = vsel %vm1050, %v1049, 0
      %1063 = vmatpush.bf16.xpose.msra.mxu0 0
      %1064 = vmatpush.bf16.xpose.msra.mxu0 0
      %1065 = vmatpush.bf16.xpose.msra.mxu0 0
      %1066 = vmatpush.bf16.xpose.msra.mxu0 0
      %1067 = vmatpush.bf16.xpose.msra.mxu0 0
      %1068 = vmatpush.bf16.xpose.msra.mxu0 0
      %1069 = vmatpush.bf16.xpose.msra.mxu0 %v1061
      %1070 = vmatpush.bf16.xpose.msra.mxu0 %v1058
      %1071 = vmatmul.bf16.gmra.mxu0 %v1052
      %v1072 = vpop.f32.mrf.mxu0
      %v1073 = vadd.f32 %v1028, %v1072
      %v1074 = vpop.f32.mrf.mxu0
      %v1075 = vadd.f32 %v1028, %v1074
      %1076 = vmatmul.bf16.gmra.mxu0 %v1055
      %v1077 = vpop.f32.mrf.mxu0
      %v1078 = vadd.f32 %v1028, %v1077
      %v1079 = vpop.f32.mrf.mxu0
      %1080 = vdwg.mxu0
      %vm1081 = vcmask 195584
      %v1082 = vsel %vm1081, %v1073, -inf
      %1083 = vmax.xlane.f32.xlu0 %v1082
      %v1084 = vpop.xlane.xlu0 %1083
      %v1085 = vsel %vm1081, %v1075, -inf
      %1086 = vmax.xlane.f32.xlu0 %v1085
      %v1087 = vpop.xlane.xlu0 %1086
      %v1088 = vsel %vm1081, %v1078, -inf
      %1089 = vmax.xlane.f32.xlu0 %v1088
      %v1090 = vpop.xlane.xlu0 %1089
      %v1091 = vsub.f32 %v1073, %v1084
      %v1092 = vsub.f32 %v1075, %v1087
      %v1093 = vsub.f32 %v1078, %v1090
      %v1094 = vmul.f32 %v1091, 1.442695
      %v1095 = vpow.pop %v1094
      %v1096 = vmul.f32 %v1092, 1.442695
      %v1097 = vpow.pop %v1096
      %v1098 = vmul.f32 %v1093, 1.442695
      %v1099 = vpow.pop %v1098
      %v1100 = vsel %vm1081, %v1095, 0.0
      %1101 = vadd.xlane.f32.xlu0 %v1100
      %v1102 = vpop.xlane.xlu0 %1101
      %v1103 = vsel %vm1081, %v1097, 0.0
      %1104 = vadd.xlane.f32.xlu0 %v1103
      %v1105 = vpop.xlane.xlu0 %1104
      %v1106 = vsel %vm1081, %v1099, 0.0
      %1107 = vadd.xlane.f32.xlu0 %v1106
      %v1108 = vpop.xlane.xlu0 %1107
      %v1109 = vrcp.pop %v1102
      %v1110 = vrcp.pop %v1105
      %v1111 = vrcp.pop %v1108
      %v1112 = vmul.f32 %v1095, %v1109
      %v1113 = vmul.f32 %v1097, %v1110
      %v1114 = vmul.f32 %v1099, %v1111
      %v1115 = vpack.c.bf16 %v1113, %v1112
      %v1116 = vpack.c.bf16 %v1114, %v1114
      %1117 = vrot.lane.b32.xlu0 %v1044, 64
      %v1118 = vpop.permute.xlu0 %1117
      %1119 = vrot.lane.b32.xlu0 %v1045, 64
      %v1120 = vpop.permute.xlu0 %1119
      %v1123 = vsel %vm1081, %v1115, 0
      %v1126 = vsel %vm1081, %v1116, 0
      %vm1128 = vcmask 1043456
      %v1130 = vsel %vm1128, %v1120, 0
      %1132 = vmatpush.bf16.msra.mxu0 0
      %1133 = vmatpush.bf16.msra.mxu0 0
      %1134 = vmatpush.bf16.msra.mxu0 0
      %1135 = vmatpush.bf16.msra.mxu0 0
      %1136 = vmatpush.bf16.msra.mxu0 0
      %1137 = vmatpush.bf16.msra.mxu0 0
      %1138 = vmatpush.bf16.msra.mxu0 %v1130
      %1139 = vmatpush.bf16.msra.mxu0 %v1118
      %1140 = vmatmul.bf16.gmra.mxu0 %v1123
      %v1141 = vpop.f32.mrf.mxu0
      %v1142 = vadd.f32 0.0, %v1141
      %v1143 = vpop.f32.mrf.mxu0
      %v1144 = vadd.f32 0.0, %v1143
      %1145 = vmatmul.bf16.gmra.mxu0 %v1126
      %v1146 = vpop.f32.mrf.mxu0
      %v1147 = vadd.f32 0.0, %v1146
      %v1148 = vpop.f32.mrf.mxu0
      %1149 = vdwg.mxu0
      %1150 = vrot.lane.b32.xlu0 %v1036, 112
      %v1151 = vpop.permute.xlu0 %1150
      %1152 = vrot.lane.b32.xlu0 %v1037, 112
      %v1153 = vpop.permute.xlu0 %1152
      %1154 = vrot.lane.b32.xlu0 %v1044, 80
      %v1155 = vpop.permute.xlu0 %1154
      %1156 = vrot.lane.b32.xlu0 %v1045, 80
      %v1157 = vpop.permute.xlu0 %1156
      %v1159 = vsel %vm1050, %v1151, 0
      %v1162 = vsel %vm1050, %v1153, 0
      %v1165 = vsel %vm1050, %v1155, 0
      %v1168 = vsel %vm1050, %v1157, 0
      %1170 = vmatpush.bf16.xpose.msra.mxu0 0
      %1171 = vmatpush.bf16.xpose.msra.mxu0 0
      %1172 = vmatpush.bf16.xpose.msra.mxu0 0
      %1173 = vmatpush.bf16.xpose.msra.mxu0 0
      %1174 = vmatpush.bf16.xpose.msra.mxu0 0
      %1175 = vmatpush.bf16.xpose.msra.mxu0 0
      %1176 = vmatpush.bf16.xpose.msra.mxu0 %v1168
      %1177 = vmatpush.bf16.xpose.msra.mxu0 %v1165
      %1178 = vmatmul.bf16.gmra.mxu0 %v1159
      %v1179 = vpop.f32.mrf.mxu0
      %v1180 = vadd.f32 %v1028, %v1179
      %v1181 = vpop.f32.mrf.mxu0
      %v1182 = vadd.f32 %v1028, %v1181
      %1183 = vmatmul.bf16.gmra.mxu0 %v1162
      %v1184 = vpop.f32.mrf.mxu0
      %v1185 = vadd.f32 %v1028, %v1184
      %v1186 = vpop.f32.mrf.mxu0
      %1187 = vdwg.mxu0
      %v1188 = vsel %vm1081, %v1180, -inf
      %1189 = vmax.xlane.f32.xlu0 %v1188
      %v1190 = vpop.xlane.xlu0 %1189
      %v1191 = vsel %vm1081, %v1182, -inf
      %1192 = vmax.xlane.f32.xlu0 %v1191
      %v1193 = vpop.xlane.xlu0 %1192
      %v1194 = vsel %vm1081, %v1185, -inf
      %1195 = vmax.xlane.f32.xlu0 %v1194
      %v1196 = vpop.xlane.xlu0 %1195
      %v1197 = vsub.f32 %v1180, %v1190
      %v1198 = vsub.f32 %v1182, %v1193
      %v1199 = vsub.f32 %v1185, %v1196
      %v1200 = vmul.f32 %v1197, 1.442695
      %v1201 = vpow.pop %v1200
      %v1202 = vmul.f32 %v1198, 1.442695
      %v1203 = vpow.pop %v1202
      %v1204 = vmul.f32 %v1199, 1.442695
      %v1205 = vpow.pop %v1204
      %v1206 = vsel %vm1081, %v1201, 0.0
      %1207 = vadd.xlane.f32.xlu0 %v1206
      %v1208 = vpop.xlane.xlu0 %1207
      %v1209 = vsel %vm1081, %v1203, 0.0
      %1210 = vadd.xlane.f32.xlu0 %v1209
      %v1211 = vpop.xlane.xlu0 %1210
      %v1212 = vsel %vm1081, %v1205, 0.0
      %1213 = vadd.xlane.f32.xlu0 %v1212
      %v1214 = vpop.xlane.xlu0 %1213
      %v1215 = vrcp.pop %v1208
      %v1216 = vrcp.pop %v1211
      %v1217 = vrcp.pop %v1214
      %v1218 = vmul.f32 %v1201, %v1215
      %v1219 = vmul.f32 %v1203, %v1216
      %v1220 = vmul.f32 %v1205, %v1217
      %v1221 = vpack.c.bf16 %v1219, %v1218
      %v1222 = vpack.c.bf16 %v1220, %v1220
      %1223 = vrot.lane.b32.xlu0 %v1044, 48
      %v1224 = vpop.permute.xlu0 %1223
      %1225 = vrot.lane.b32.xlu0 %v1045, 48
      %v1226 = vpop.permute.xlu0 %1225
      %v1229 = vsel %vm1081, %v1221, 0
      %v1232 = vsel %vm1081, %v1222, 0
      %v1235 = vsel %vm1128, %v1226, 0
      %1237 = vmatpush.bf16.msra.mxu0 0
      %1238 = vmatpush.bf16.msra.mxu0 0
      %1239 = vmatpush.bf16.msra.mxu0 0
      %1240 = vmatpush.bf16.msra.mxu0 0
      %1241 = vmatpush.bf16.msra.mxu0 0
      %1242 = vmatpush.bf16.msra.mxu0 0
      %1243 = vmatpush.bf16.msra.mxu0 %v1235
      %1244 = vmatpush.bf16.msra.mxu0 %v1224
      %1245 = vmatmul.bf16.gmra.mxu0 %v1229
      %v1246 = vpop.f32.mrf.mxu0
      %v1247 = vadd.f32 0.0, %v1246
      %v1248 = vpop.f32.mrf.mxu0
      %v1249 = vadd.f32 0.0, %v1248
      %1250 = vmatmul.bf16.gmra.mxu0 %v1232
      %v1251 = vpop.f32.mrf.mxu0
      %v1252 = vadd.f32 0.0, %v1251
      %v1253 = vpop.f32.mrf.mxu0
      %1254 = vdwg.mxu0
      %1258 = vrot.lane.b32.xlu0 %v1247, 16
      %v1259 = vpop.permute.xlu0 %1258
      %1260 = vrot.lane.b32.xlu0 %v1249, 16
      %v1261 = vpop.permute.xlu0 %1260
      %1262 = vrot.lane.b32.xlu0 %v1252, 16
      %v1263 = vpop.permute.xlu0 %1262
      %v1267 = vsel %vm1050, %v1142, %v1259
      %v1268 = vsel %vm1050, %v1144, %v1261
      %v1269 = vsel %vm1050, %v1147, %v1263
      %v1270 = vpack.c.bf16 %v1268, %v1267
      %v1271 = vpack.c.bf16 %v1269, %v1269
      %v1272 = vld [vmem:[%s766] sm:$0xf]
      %v1273 = vld [vmem:[%s766 + $0x4] sm:$0xf]
      %v1274 = vld [vmem:[%s766 + $0x8] sm:$0xf]
      %v1275 = vld [vmem:[%s766 + $0xc] sm:$0xf]
      %v1276 = vld [vmem:[%s769] sm:$0x1]
      %v1278 = vperm.slane %v1276, 0
      %v1284 = vunpack.c.l.b16 %v1272
      %v1285 = vunpack.c.l.b16 %v1273
      %v1286 = vunpack.c.l.b16 %v1274
      %v1287 = vunpack.c.l.b16 %v1275
      %v1288 = vpack.c.b16 %v1285, %v1284
      %v1289 = vpack.c.b16 %v1287, %v1286
      %v1293 = vsel %vm886, %v1270, 0
      %v1296 = vsel %vm886, %v1271, 0
      %1298 = vmatpush.bf16.msra.mxu0 0
      %1299 = vmatpush.bf16.msra.mxu0 0
      %1300 = vmatpush.bf16.msra.mxu0 0
      %1301 = vmatpush.bf16.msra.mxu0 0
      %1302 = vmatpush.bf16.msra.mxu0 0
      %1303 = vmatpush.bf16.msra.mxu0 0
      %1304 = vmatpush.bf16.msra.mxu0 %v1289
      %1305 = vmatpush.bf16.msra.mxu0 %v1288
      %1306 = vmatmul.bf16.gmra.mxu0 %v1293
      %v1307 = vpop.f32.mrf.mxu0
      %v1308 = vadd.f32 %v1278, %v1307
      %v1309 = vpop.f32.mrf.mxu0
      %v1310 = vadd.f32 %v1278, %v1309
      %1311 = vmatmul.bf16.gmra.mxu0 %v1296
      %v1312 = vpop.f32.mrf.mxu0
      %v1313 = vadd.f32 %v1278, %v1312
      %v1314 = vpop.f32.mrf.mxu0
      %1315 = vdwg.mxu0
      %v1316 = vadd.f32 %v880, %v1308
      %v1317 = vadd.f32 %v881, %v1310
      %v1318 = vadd.f32 %v882, %v1313
      %v1319 = vld [vmem:[%s772] sm:$0x1]
      %v1320 = vld [vmem:[%s775] sm:$0x1]
      %v1321 = vsel %vm886, %v1316, 0.0
      %1322 = vadd.xlane.f32.xlu0 %v1321
      %v1323 = vpop.xlane.xlu0 %1322
      %v1324 = vsel %vm886, %v1317, 0.0
      %1325 = vadd.xlane.f32.xlu0 %v1324
      %v1326 = vpop.xlane.xlu0 %1325
      %v1327 = vsel %vm886, %v1318, 0.0
      %1328 = vadd.xlane.f32.xlu0 %v1327
      %v1329 = vpop.xlane.xlu0 %1328
      %v1330 = vmul.f32 %v1323, %v902
      %v1331 = vmul.f32 %v1326, %v902
      %v1332 = vmul.f32 %v1329, %v902
      %v1333 = vsub.f32 %v1316, %v1330
      %v1334 = vsub.f32 %v1317, %v1331
      %v1335 = vsub.f32 %v1318, %v1332
      %v1336 = vmul.f32 %v1333, %v1333
      %v1337 = vmul.f32 %v1334, %v1334
      %v1338 = vmul.f32 %v1335, %v1335
      %v1339 = vsel %vm886, %v1336, 0.0
      %1340 = vadd.xlane.f32.xlu0 %v1339
      %v1341 = vpop.xlane.xlu0 %1340
      %v1342 = vsel %vm886, %v1337, 0.0
      %1343 = vadd.xlane.f32.xlu0 %v1342
      %v1344 = vpop.xlane.xlu0 %1343
      %v1345 = vsel %vm886, %v1338, 0.0
      %1346 = vadd.xlane.f32.xlu0 %v1345
      %v1347 = vpop.xlane.xlu0 %1346
      %v1348 = vmul.f32 %v1341, %v902
      %v1349 = vmul.f32 %v1344, %v902
      %v1350 = vmul.f32 %v1347, %v902
      %v1351 = vadd.f32 %v1348, 1e-06
      %v1352 = vadd.f32 %v1349, 1e-06
      %v1353 = vadd.f32 %v1350, 1e-06
      %v1354 = vrsqrt.pop %v1351
      %v1355 = vmul.f32 %v1354, %v1351
      %v1356 = vmul.f32 %v1355, %v1354
      %v1357 = vmul.f32 0.5, %v1356
      %v1358 = vsub.f32 1.5, %v1357
      %v1359 = vmul.f32 %v1354, %v1358
      %vm1360 = vweird.f32 %v1351
      %vm1361 = vweird.f32 %v1354
      %vm1362 = vmor %vm1360, %vm1361
      %v1363 = vsel %vm1362, %v1354, %v1359
      %v1364 = vrsqrt.pop %v1352
      %v1365 = vmul.f32 %v1364, %v1352
      %v1366 = vmul.f32 %v1365, %v1364
      %v1367 = vmul.f32 0.5, %v1366
      %v1368 = vsub.f32 1.5, %v1367
      %v1369 = vmul.f32 %v1364, %v1368
      %vm1370 = vweird.f32 %v1352
      %vm1371 = vweird.f32 %v1364
      %vm1372 = vmor %vm1370, %vm1371
      %v1373 = vsel %vm1372, %v1364, %v1369
      %v1374 = vrsqrt.pop %v1353
      %v1375 = vmul.f32 %v1374, %v1353
      %v1376 = vmul.f32 %v1375, %v1374
      %v1377 = vmul.f32 0.5, %v1376
      %v1378 = vsub.f32 1.5, %v1377
      %v1379 = vmul.f32 %v1374, %v1378
      %vm1380 = vweird.f32 %v1353
      %vm1381 = vweird.f32 %v1374
      %vm1382 = vmor %vm1380, %vm1381
      %v1383 = vsel %vm1382, %v1374, %v1379
      %v1384 = vmul.f32 %v1333, %v1363
      %v1385 = vmul.f32 %v1334, %v1373
      %v1386 = vmul.f32 %v1335, %v1383
      %v1388 = vperm.slane %v1319, 0
      %v1390 = vmul.f32 %v1384, %v1388
      %v1391 = vmul.f32 %v1385, %v1388
      %v1392 = vmul.f32 %v1386, %v1388
      %v1394 = vperm.slane %v1320, 0
      %v1396 = vadd.f32 %v1390, %v1394
      %v1397 = vadd.f32 %v1391, %v1394
      %v1398 = vadd.f32 %v1392, %v1394
      %v1399 = vpack.c.bf16 %v1397, %v1396
      %v1400 = vpack.c.bf16 %v1398, %v1398
      %v1401 = vld [vmem:[%s780] sm:$0xf]
      %v1402 = vld [vmem:[%s780 + $0x4] sm:$0xf]
      %v1403 = vld [vmem:[%s780 + $0x8] sm:$0xf]
      %v1404 = vld [vmem:[%s780 + $0xc] sm:$0xf]
      %v1405 = vld [vmem:[%s783] sm:$0x1]
      %v1407 = vperm.slane %v1405, 0
      %v1413 = vunpack.c.l.b16 %v1401
      %v1414 = vunpack.c.l.b16 %v1402
      %v1415 = vunpack.c.l.b16 %v1403
      %v1416 = vunpack.c.l.b16 %v1404
      %v1417 = vpack.c.b16 %v1414, %v1413
      %v1418 = vpack.c.b16 %v1416, %v1415
      %v1422 = vsel %vm886, %v1399, 0
      %v1425 = vsel %vm886, %v1400, 0
      %1427 = vmatpush.bf16.msra.mxu0 0
      %1428 = vmatpush.bf16.msra.mxu0 0
      %1429 = vmatpush.bf16.msra.mxu0 0
      %1430 = vmatpush.bf16.msra.mxu0 0
      %1431 = vmatpush.bf16.msra.mxu0 0
      %1432 = vmatpush.bf16.msra.mxu0 0
      %1433 = vmatpush.bf16.msra.mxu0 %v1418
      %1434 = vmatpush.bf16.msra.mxu0 %v1417
      %1435 = vmatmul.bf16.gmra.mxu0 %v1422
      %v1436 = vpop.f32.mrf.mxu0
      %v1437 = vadd.f32 %v1407, %v1436
      %v1438 = vpop.f32.mrf.mxu0
      %v1439 = vadd.f32 %v1407, %v1438
      %1440 = vmatmul.bf16.gmra.mxu0 %v1425
      %v1441 = vpop.f32.mrf.mxu0
      %v1442 = vadd.f32 %v1407, %v1441
      %v1443 = vpop.f32.mrf.mxu0
      %1444 = vdwg.mxu0
      %v1445 = vmul.f32 %v1437, %v1437
      %v1446 = vmul.f32 %v1439, %v1439
      %v1447 = vmul.f32 %v1442, %v1442
      %v1448 = vmul.f32 %v1437, %v1445
      %v1449 = vmul.f32 %v1439, %v1446
      %v1450 = vmul.f32 %v1442, %v1447
      %v1451 = vmul.f32 %v1448, 0.044715
      %v1452 = vmul.f32 %v1449, 0.044715
      %v1453 = vmul.f32 %v1450, 0.044715
      %v1454 = vadd.f32 %v1437, %v1451
      %v1455 = vadd.f32 %v1439, %v1452
      %v1456 = vadd.f32 %v1442, %v1453
      %v1457 = vmul.f32 %v1454, 0.7978846
      %v1458 = vmul.f32 %v1455, 0.7978846
      %v1459 = vmul.f32 %v1456, 0.7978846
      %v1460 = vtanh.pop %v1457
      %v1461 = vtanh.pop %v1458
      %v1462 = vtanh.pop %v1459
      %v1463 = vadd.f32 %v1460, 1.0
      %v1464 = vadd.f32 %v1461, 1.0
      %v1465 = vadd.f32 %v1462, 1.0
      %v1466 = vmul.f32 %v1463, 0.5
      %v1467 = vmul.f32 %v1464, 0.5
      %v1468 = vmul.f32 %v1465, 0.5
      %v1469 = vmul.f32 %v1437, %v1466
      %v1470 = vmul.f32 %v1439, %v1467
      %v1471 = vmul.f32 %v1442, %v1468
      %v1472 = vpack.c.bf16 %v1470, %v1469
      %v1473 = vpack.c.bf16 %v1471, %v1471
      %v1474 = vld [vmem:[%s788] sm:$0xf]
      %v1475 = vld [vmem:[%s788 + $0x4] sm:$0xf]
      %v1476 = vld [vmem:[%s788 + $0x8] sm:$0xf]
      %v1477 = vld [vmem:[%s788 + $0xc] sm:$0xf]
      %v1478 = vld [vmem:[%s788 + $0x10] sm:$0xf]
      %v1479 = vld [vmem:[%s788 + $0x14] sm:$0xf]
      %v1480 = vld [vmem:[%s788 + $0x18] sm:$0xf]
      %v1481 = vld [vmem:[%s788 + $0x1c] sm:$0xf]
      %v1482 = vld [vmem:[%s788 + $0x20] sm:$0xf]
      %v1483 = vld [vmem:[%s788 + $0x24] sm:$0xf]
      %v1484 = vld [vmem:[%s788 + $0x28] sm:$0xf]
      %v1485 = vld [vmem:[%s788 + $0x2c] sm:$0xf]
      %v1486 = vld [vmem:[%s788 + $0x30] sm:$0xf]
      %v1487 = vld [vmem:[%s788 + $0x34] sm:$0xf]
      %v1488 = vld [vmem:[%s788 + $0x38] sm:$0xf]
      %v1489 = vld [vmem:[%s788 + $0x3c] sm:$0xf]
      %v1490 = vld [vmem:[%s791] sm:$0x1]
      %v1492 = vperm.slane %v1490, 0
      %v1510 = vunpack.c.l.b16 %v1474
      %v1511 = vunpack.c.l.b16 %v1475
      %v1512 = vunpack.c.l.b16 %v1476
      %v1513 = vunpack.c.l.b16 %v1477
      %v1514 = vunpack.c.l.b16 %v1478
      %v1515 = vunpack.c.l.b16 %v1479
      %v1516 = vunpack.c.l.b16 %v1480
      %v1517 = vunpack.c.l.b16 %v1481
      %v1518 = vunpack.c.l.b16 %v1482
      %v1519 = vunpack.c.l.b16 %v1483
      %v1520 = vunpack.c.l.b16 %v1484
      %v1521 = vunpack.c.l.b16 %v1485
      %v1522 = vunpack.c.l.b16 %v1486
      %v1523 = vunpack.c.l.b16 %v1487
      %v1524 = vunpack.c.l.b16 %v1488
      %v1525 = vunpack.c.l.b16 %v1489
      %v1526 = vpack.c.b16 %v1511, %v1510
      %v1527 = vpack.c.b16 %v1513, %v1512
      %v1528 = vpack.c.b16 %v1515, %v1514
      %v1529 = vpack.c.b16 %v1517, %v1516
      %v1530 = vpack.c.b16 %v1519, %v1518
      %v1531 = vpack.c.b16 %v1521, %v1520
      %v1532 = vpack.c.b16 %v1523, %v1522
      %v1533 = vpack.c.b16 %v1525, %v1524
      %1542 = vmatpush.bf16.msra.mxu0 %v1533
      %1543 = vmatpush.bf16.msra.mxu0 %v1532
      %1544 = vmatpush.bf16.msra.mxu0 %v1531
      %1545 = vmatpush.bf16.msra.mxu0 %v1530
      %1546 = vmatpush.bf16.msra.mxu0 %v1529
      %1547 = vmatpush.bf16.msra.mxu0 %v1528
      %1548 = vmatpush.bf16.msra.mxu0 %v1527
      %1549 = vmatpush.bf16.msra.mxu0 %v1526
      %1550 = vmatmul.bf16.gmra.mxu0 %v1472
      %v1551 = vpop.f32.mrf.mxu0
      %v1552 = vadd.f32 %v1492, %v1551
      %v1553 = vpop.f32.mrf.mxu0
      %v1554 = vadd.f32 %v1492, %v1553
      %1555 = vmatmul.bf16.gmra.mxu0 %v1473
      %v1556 = vpop.f32.mrf.mxu0
      %v1557 = vadd.f32 %v1492, %v1556
      %v1558 = vpop.f32.mrf.mxu0
      %1559 = vdwg.mxu0
      %v1560 = vadd.f32 %v1316, %v1552
      %v1561 = vadd.f32 %v1317, %v1554
      %v1562 = vadd.f32 %v1318, %v1557
      %1563 = vst.msk [vmem:[#allocation2] sm:$0xff] %vm886, %v1560
      %1564 = vst.msk [vmem:[#allocation2 + $0x8] sm:$0xff] %vm886, %v1561
      %1565 = vst.msk [vmem:[#allocation2 + $0x10] sm:$0xff] %vm886, %v1562
      %p1566 = scmp.ge.s32.totalorder %s34, 1
      // Predicated region
      $region97: #{get_intermediate_layers.1} parent=91 // pred_check
        %p1567 = pneg %p1566
      $region98: #{get_intermediate_layers.1} parent=91 // pred_check_branch
        %1569 = sbr.rel (%p1567) target = $region100
      $region99: #{get_intermediate_layers.1} parent=91 // pred_region
        %v1570 = vld [vmem:[%s16] sm:$0x1]
        %v1571 = vld [vmem:[%s17] sm:$0x1]
        %v1572 = vsel %vm886, %v1560, 0.0
        %1573 = vadd.xlane.f32.xlu0 %v1572
        %v1574 = vpop.xlane.xlu0 %1573
        %v1575 = vsel %vm886, %v1561, 0.0
        %1576 = vadd.xlane.f32.xlu0 %v1575
        %v1577 = vpop.xlane.xlu0 %1576
        %v1578 = vsel %vm886, %v1562, 0.0
        %1579 = vadd.xlane.f32.xlu0 %v1578
        %v1580 = vpop.xlane.xlu0 %1579
        %v1581 = vmul.f32 %v1574, %v902
        %v1582 = vmul.f32 %v1577, %v902
        %v1583 = vmul.f32 %v1580, %v902
        %v1584 = vsub.f32 %v1560, %v1581
        %v1585 = vsub.f32 %v1561, %v1582
        %v1586 = vsub.f32 %v1562, %v1583
        %v1587 = vmul.f32 %v1584, %v1584
        %v1588 = vmul.f32 %v1585, %v1585
        %v1589 = vmul.f32 %v1586, %v1586
        %v1590 = vsel %vm886, %v1587, 0.0
        %1591 = vadd.xlane.f32.xlu0 %v1590
        %v1592 = vpop.xlane.xlu0 %1591
        %v1593 = vsel %vm886, %v1588, 0.0
        %1594 = vadd.xlane.f32.xlu0 %v1593
        %v1595 = vpop.xlane.xlu0 %1594
        %v1596 = vsel %vm886, %v1589, 0.0
        %1597 = vadd.xlane.f32.xlu0 %v1596
        %v1598 = vpop.xlane.xlu0 %1597
        %v1599 = vmul.f32 %v1592, %v902
        %v1600 = vmul.f32 %v1595, %v902
        %v1601 = vmul.f32 %v1598, %v902
        %v1602 = vadd.f32 %v1599, 1e-06
        %v1603 = vadd.f32 %v1600, 1e-06
        %v1604 = vadd.f32 %v1601, 1e-06
        %v1605 = vrsqrt.pop %v1602
        %v1606 = vmul.f32 %v1605, %v1602
        %v1607 = vmul.f32 %v1606, %v1605
        %v1608 = vmul.f32 0.5, %v1607
        %v1609 = vsub.f32 1.5, %v1608
        %v1610 = vmul.f32 %v1605, %v1609
        %vm1611 = vweird.f32 %v1602
        %vm1612 = vweird.f32 %v1605
        %vm1613 = vmor %vm1611, %vm1612
        %v1614 = vsel %vm1613, %v1605, %v1610
        %v1615 = vrsqrt.pop %v1603
        %v1616 = vmul.f32 %v1615, %v1603
        %v1617 = vmul.f32 %v1616, %v1615
        %v1618 = vmul.f32 0.5, %v1617
        %v1619 = vsub.f32 1.5, %v1618
        %v1620 = vmul.f32 %v1615, %v1619
        %vm1621 = vweird.f32 %v1603
        %vm1622 = vweird.f32 %v1615
        %vm1623 = vmor %vm1621, %vm1622
        %v1624 = vsel %vm1623, %v1615, %v1620
        %v1625 = vrsqrt.pop %v1604
        %v1626 = vmul.f32 %v1625, %v1604
        %v1627 = vmul.f32 %v1626, %v1625
        %v1628 = vmul.f32 0.5, %v1627
        %v1629 = vsub.f32 1.5, %v1628
        %v1630 = vmul.f32 %v1625, %v1629
        %vm1631 = vweird.f32 %v1604
        %vm1632 = vweird.f32 %v1625
        %vm1633 = vmor %vm1631, %vm1632
        %v1634 = vsel %vm1633, %v1625, %v1630
        %v1635 = vmul.f32 %v1584, %v1614
        %v1636 = vmul.f32 %v1585, %v1624
        %v1637 = vmul.f32 %v1586, %v1634
        %v1639 = vperm.slane %v1570, 0
        %v1641 = vmul.f32 %v1635, %v1639
        %v1642 = vmul.f32 %v1636, %v1639
        %v1643 = vmul.f32 %v1637, %v1639
        %v1645 = vperm.slane %v1571, 0
        %v1647 = vadd.f32 %v1641, %v1645
        %v1648 = vadd.f32 %v1642, %v1645
        %v1649 = vadd.f32 %v1643, %v1645
        %1650 = vst.msk [vmem:[%s803] sm:$0xff] %vm886, %v1647
        %1651 = vst.msk [vmem:[%s803 + $0x8] sm:$0xff] %vm886, %v1648
        %1652 = vst.msk [vmem:[%s803 + $0x10] sm:$0xff] %vm886, %v1649
      $region100: #{get_intermediate_layers.1} parent=91 // pred_fallthru
        _
      %s1653 = ssub.s32 %s34, 1
      %p1654 = scmp.gt.s32.totalorder %s1653, 0
      %s1655 = scalar_select %p1654, %s1653, 0
      %s1656 = smul.u32 3, %s33
      %p1657 = scmp.lt.s32.totalorder %s1655, 1
      %s1658 = scalar_select %p1657, %s1655, 1
      %p1659 = scmp.lt.s32.totalorder %s1656, 5
      %s1660 = scalar_select %p1659, %s1656, 5
      %s1661 = smul.addr %s1658, 6
      %s1662 = sadd.s32 %s1660, %s1661
      %s1663 = smul.addr %s1662, 8
      %s1664 = scalar_lea.vmem %s18, %s1663
      // Predicated region
      $region101: #{get_intermediate_layers.1} parent=91 // pred_check
        %p1665 = pneg %p510
      $region102: #{get_intermediate_layers.1} parent=91 // pred_check_branch
        %1667 = sbr.rel (%p1665) target = $region104
      $region103: #{get_intermediate_layers.1} parent=91 // pred_region
        %s1668 = ssub.s32 %s34, 1
        %p1669 = scmp.gt.s32.totalorder %s1668, 0
        %s1670 = scalar_select %p1669, %s1668, 0
        %s1671 = smul.u32 3, %s33
      $region104: #{get_intermediate_layers.1} parent=91 // pred_fallthru
        _
    $region92: #{get_intermediate_layers.1} parent=5 // pred_fallthru
      _
    %p1672 = scmp.le.s32.totalorder 2, %s24
    // Predicated region
    $region105: #{get_intermediate_layers.1} parent=5 // pred_check
      %p1673 = pneg %p1672
    $region106: #{get_intermediate_layers.1} parent=5 // pred_check_branch
      %1675 = sbr.rel (%p1673) target = $region108
    $region107: #{get_intermediate_layers.1} parent=5 // pred_region
      %s1676 = ssub.s32 %s24, 2
      // Predicated region
      $region109: #{get_intermediate_layers.1} parent=107 // pred_check
        %p1677 = pneg %p516
      $region110: #{get_intermediate_layers.1} parent=107 // pred_check_branch
        %1679 = sbr.rel (%p1677) target = $region112
      $region111: #{get_intermediate_layers.1} parent=107 // pred_region
        %s1680 = ssub.s32 %s36, 1
        %p1681 = scmp.gt.s32.totalorder %s1680, 0
        %s1682 = scalar_select %p1681, %s1680, 0
        %s1683 = smul.u32 3, %s35
        %p1684 = scmp.lt.s32.totalorder %s1682, 1
        %s1685 = scalar_select %p1684, %s1682, 1
        %p1686 = scmp.lt.s32.totalorder %s1683, 5
        %s1687 = scalar_select %p1686, %s1683, 5
        %s1688 = smul.addr %s1685, 6
        %s1689 = sadd.s32 %s1687, %s1688
        %s1690 = smul.addr %s1689, 8
        %s1691 = scalar_lea.vmem %s18, %s1690
      $region112: #{get_intermediate_layers.1} parent=107 // pred_fallthru
        _
    $region108: #{get_intermediate_layers.1} parent=5 // pred_fallthru
      _
  $region6: #{get_intermediate_layers.1} parent=0 // loop_footer
    %s28 = sadd.s32 1, %s24
  $region7: #{get_intermediate_layers.1} parent=0 // loop_footer_branch
    %23 = sbr.rel target = $region3
  $region8: #{get_intermediate_layers.1} parent=0 // loop_exit
    _

</llo_original>
